<compile_context>
chip_gen: v5e
topology: v5e:2x2
jax: 0.10.0
libtpu: 0.0.40
codegen_flags: <defaults>
</compile_context>

<pallas_src>
import functools

import jax
import jax.numpy as jnp
from jax.experimental import pallas as pl
from jax.experimental.pallas import tpu as pltpu

architecture_config = [
    (7, 64, 2, 3), 'M',
    (3, 192, 1, 1), 'M',
    (1, 128, 1, 0), (3, 256, 1, 1), (1, 256, 1, 0), (3, 512, 1, 1), 'M',
    [(1, 256, 1, 0), (3, 512, 1, 1), 4],
    (1, 512, 1, 0), (3, 1024, 1, 1), 'M',
    [(1, 512, 1, 0), (3, 1024, 1, 1), 2],
    (3, 1024, 1, 1), (3, 1024, 2, 1), (3, 1024, 1, 1), (3, 1024, 1, 1),
]


# ----------------------------------------------------------------------------
# Generation-aware knobs
# ----------------------------------------------------------------------------
@functools.lru_cache(maxsize=None)
def _vmem_limit_bytes():
    try:
        cap = int(pltpu.get_tpu_info().vmem_capacity_bytes)
    except Exception:
        cap = 64 * 1024 * 1024            # conservative fallback (v7x-sized)
    return max(32 * 1024 * 1024, (cap * 3) // 4)


def _tn_candidates():
    # Big-VMEM chips (v5e/v6e, 128 MiB) are single-TC: wider lane tiles, fewer
    # grid steps.  Small-VMEM (v7x, 64 MiB) keeps tn<=256 so Cout>=512 layers
    # retain >=2 programs on the parallel N axis for the megacore.
    return (512, 256, 128) if _vmem_limit_bytes() >= 80 * 1024 * 1024 else (256, 128)


def _compiler_params(dims):
    return pltpu.CompilerParams(dimension_semantics=dims,
                                vmem_limit_bytes=_vmem_limit_bytes())


def _round_up(x, m):
    return -(-x // m) * m


def _choose_tile(dim, candidates):
    """Return (tile, padded_dim); pads ragged dims instead of full-dim fallback."""
    for t in candidates:
        if dim >= t and dim % t == 0:
            return t, dim
    if dim <= candidates[-1]:
        return dim, dim                   # small dim: single full tile
    t = candidates[-1]
    return t, _round_up(dim, t)           # ragged large dim: pad up


def _pick_divisor_tile(dim, candidates):
    for t in candidates:
        if dim >= t and dim % t == 0:
            return t
    return dim


# ----------------------------------------------------------------------------
# Pallas kernels
# ----------------------------------------------------------------------------
def _matmul_kernel(a_ref, b_ref, bias_ref, o_ref, acc_ref, *, leaky):
    """K-tiled GEMM with f32 accumulator; epilogue = bias + optional leaky relu."""
    @pl.when(pl.program_id(2) == 0)
    def _init():
        acc_ref[...] = jnp.zeros_like(acc_ref)

    acc_ref[...] += jnp.dot(a_ref[...], b_ref[...],
                            preferred_element_type=jnp.float32)

    @pl.when(pl.program_id(2) == pl.num_programs(2) - 1)
    def _finalize():
        y = acc_ref[...] + bias_ref[...]
        if leaky:
            y = jnp.where(y > 0, y, 0.1 * y)
        o_ref[...] = y.astype(o_ref.dtype)


def _conv_s1_kernel(x_ref, w_ref, bias_ref, o_ref, *, KH, KW, Cin, Ho, Wo, leaky):
    """Stride-1 KxK conv for one image / one Cout tile.

    The padded image block stays resident in VMEM; the (kh, kw) reduction is
    KH*KW accumulating MXU dots of shifted (unit-stride) windows against
    (Cin, tn) weight slabs.  No HBM im2col.
    """
    tn = o_ref.shape[-1]
    acc = jnp.zeros((Ho * Wo, tn), jnp.float32)
    for kh in range(KH):
        for kw in range(KW):
            patch = x_ref[0, kh:kh + Ho, kw:kw + Wo, :].reshape(Ho * Wo, Cin)
            base = (kh * KW + kw) * Cin
            wk = w_ref[base:base + Cin, :]
            acc = acc + jnp.dot(patch, wk, preferred_element_type=jnp.float32)
    y = acc + bias_ref[...]
    if leaky:
        y = jnp.where(y > 0, y, 0.1 * y)
    o_ref[0] = y.reshape(Ho, Wo, tn).astype(o_ref.dtype)


def _maxpool_kernel(x_ref, o_ref):
    """2x2 / stride-2 max pool over one (1, H, W, C) image block."""
    _, h, w, c = x_ref.shape
    ho, wo = h // 2, w // 2
    for r in range(ho):
        m = jnp.maximum(x_ref[0, 2 * r], x_ref[0, 2 * r + 1])   # (W, C)
        m = m.reshape(wo, 2, c)
        o_ref[0, r] = jnp.max(m, axis=1)                        # (Wo, C)


# ----------------------------------------------------------------------------
# Pallas wrappers
# ----------------------------------------------------------------------------
def fused_matmul(a, b, bias, *, leaky, out_dtype):
    """(M,K)x(K,N) bf16 GEMM, f32 acc + bias + optional LeakyReLU(0.1)."""
    M, K = a.shape
    K2, N = b.shape
    assert K == K2
    tm, Mp = _choose_tile(M, (512, 256, 128))
    tn, Np = _choose_tile(N, _tn_candidates())
    if K <= 2048:
        tk, Kp = K, K
    else:
        tk, Kp = _choose_tile(K, (2048, 1024, 512))

    a = a.astype(jnp.bfloat16)
    b = b.astype(jnp.bfloat16)
    bias2 = bias.reshape(1, N).astype(jnp.float32)
    if (Mp, Kp) != (M, K):
        a = jnp.pad(a, ((0, Mp - M), (0, Kp - K)))
    if (Kp, Np) != (K, N):
        b = jnp.pad(b, ((0, Kp - K), (0, Np - N)))
    if Np != N:
        bias2 = jnp.pad(bias2, ((0, 0), (0, Np - N)))

    grid = (Mp // tm, Np // tn, Kp // tk)
    out = pl.pallas_call(
        functools.partial(_matmul_kernel, leaky=leaky),
        out_shape=jax.ShapeDtypeStruct((Mp, Np), out_dtype),
        grid_spec=pltpu.PrefetchScalarGridSpec(
            num_scalar_prefetch=0,
            grid=grid,
            in_specs=[
                pl.BlockSpec((tm, tk), lambda i, j, k: (i, k)),
                pl.BlockSpec((tk, tn), lambda i, j, k: (k, j)),
                pl.BlockSpec((1, tn), lambda i, j, k: (0, j)),
            ],
            out_specs=pl.BlockSpec((tm, tn), lambda i, j, k: (i, j)),
            scratch_shapes=[pltpu.VMEM((tm, tn), jnp.float32)],
        ),
        compiler_params=_compiler_params(("parallel", "parallel", "arbitrary")),
    )(a, b, bias2)
    if (Mp, Np) != (M, N):
        out = out[:M, :N]
    return out


def conv_s1_fused(x, w2d, bias, ksize, padding):
    """Stride-1 KxK conv + folded BN + LeakyReLU with the patch gather in-kernel."""
    N, H, W, Cin = x.shape
    KH = KW = ksize
    Cout = w2d.shape[1]
    assert w2d.shape[0] == KH * KW * Cin
    Ho = H + 2 * padding - KH + 1
    Wo = W + 2 * padding - KW + 1
    Hp, Wp = H + 2 * padding, W + 2 * padding
    xp = x if padding == 0 else jnp.pad(
        x, ((0, 0), (padding, padding), (padding, padding), (0, 0)))

    tn = _pick_divisor_tile(Cout, _tn_candidates())
    grid = (Cout // tn, N)   # batch innermost -> streamed weight tile is revisited
    kern = functools.partial(_conv_s1_kernel, KH=KH, KW=KW, Cin=Cin,
                             Ho=Ho, Wo=Wo, leaky=True)
    return pl.pallas_call(
        kern,
        out_shape=jax.ShapeDtypeStruct((N, Ho, Wo, Cout), x.dtype),
        grid_spec=pltpu.PrefetchScalarGridSpec(
            num_scalar_prefetch=0,
            grid=grid,
            in_specs=[
                pl.BlockSpec((1, Hp, Wp, Cin), lambda j, n: (n, 0, 0, 0)),
                pl.BlockSpec((KH * KW * Cin, tn), lambda j, n: (0, j)),
                pl.BlockSpec((1, tn), lambda j, n: (0, j)),
            ],
            out_specs=pl.BlockSpec((1, Ho, Wo, tn), lambda j, n: (n, 0, 0, j)),
        ),
        compiler_params=_compiler_params(("parallel", "parallel")),
    )(xp, w2d.astype(jnp.bfloat16), bias.reshape(1, Cout).astype(jnp.float32))


def maxpool2x2(x):
    """MaxPool2d(kernel=2, stride=2) on NHWC; one program per image."""
    N, H, W, C = x.shape
    Ho, Wo = H // 2, W // 2
    return pl.pallas_call(
        _maxpool_kernel,
        out_shape=jax.ShapeDtypeStruct((N, Ho, Wo, C), x.dtype),
        grid_spec=pltpu.PrefetchScalarGridSpec(
            num_scalar_prefetch=0,
            grid=(N,),
            in_specs=[pl.BlockSpec((1, H, W, C), lambda n: (n, 0, 0, 0))],
            out_specs=pl.BlockSpec((1, Ho, Wo, C), lambda n: (n, 0, 0, 0)),
        ),
        compiler_params=_compiler_params(("parallel",)),
    )(x)


def conv_bn_leaky(x, w2d, bias, ksize, stride, padding):
    """CNNBlock: conv(bias=False) -> BN(eval, folded) -> LeakyReLU(0.1)."""
    N, H, W, Cin = x.shape
    Cout = w2d.shape[1]
    Ho = (H + 2 * padding - ksize) // stride + 1
    Wo = (W + 2 * padding - ksize) // stride + 1

    if ksize == 1 and stride == 1 and padding == 0:
        a = x.reshape(N * H * W, Cin)                      # 1x1 conv: pure GEMM
        y = fused_matmul(a, w2d, bias, leaky=True, out_dtype=x.dtype)
        return y.reshape(N, Ho, Wo, Cout)

    if stride == 1:
        return conv_s1_fused(x, w2d, bias, ksize, padding)  # no HBM im2col

    # Strided convs (7x7/s2 stem, 3x3/s2): XLA-side im2col feeding the GEMM.
    # TODO(synk): fold the strided patch gather into the kernel too.
    xp = jnp.pad(x, ((0, 0), (padding, padding), (padding, padding), (0, 0)))
    cols = [xp[:, kh:kh + Ho * stride:stride, kw:kw + Wo * stride:stride, :]
            for kh in range(ksize) for kw in range(ksize)]
    a = jnp.concatenate(cols, axis=-1).reshape(N * Ho * Wo, ksize * ksize * Cin)
    y = fused_matmul(a, w2d, bias, leaky=True, out_dtype=x.dtype)
    return y.reshape(N, Ho, Wo, Cout)


# ----------------------------------------------------------------------------
# Parameter construction (deterministic, synthetic)
# ----------------------------------------------------------------------------
def init_yolo_params(key, in_channels=3, split_size=1, num_boxes=2,
                     num_classes=3, fcl_size=256):
    S, B, C = split_size, num_boxes, num_classes

    def make_block(k, cin, cout, ksize, stride, padding):
        kw_, kb = jax.random.split(k)
        w = jax.random.normal(kw_, (ksize, ksize, cin, cout), jnp.float32) \
            * jnp.sqrt(2.0 / (ksize * ksize * cin))
        g1, g2, g3, g4 = jax.random.split(kb, 4)
        gamma = 1.0 + 0.1 * jax.random.normal(g1, (cout,), jnp.float32)
        beta = 0.1 * jax.random.normal(g2, (cout,), jnp.float32)
        rmean = 0.1 * jax.random.normal(g3, (cout,), jnp.float32)
        rvar = 1.0 + 0.1 * jnp.abs(jax.random.normal(g4, (cout,), jnp.float32))
        scale = gamma / jnp.sqrt(rvar + 1e-5)            # BN(eval) fold
        bias = beta - rmean * scale                      # stays f32
        w2d = (w * scale).astype(jnp.bfloat16).reshape(ksize * ksize * cin, cout)
        return dict(type='conv', w=w2d, bias=bias,
                    ksize=ksize, stride=stride, padding=padding)

    keys = iter(jax.random.split(key, 64))
    darknet = []
    cin = in_channels
    for item in architecture_config:
        if isinstance(item, tuple):
            ksize, cout, s, p = item
            darknet.append(make_block(next(keys), cin, cout, ksize, s, p))
            cin = cout
        elif isinstance(item, str):
            darknet.append(dict(type='maxpool'))
        else:
            conv1, conv2, reps = item
            for _ in range(reps):
                darknet.append(make_block(next(keys), cin, conv1[1],
                                          conv1[0], conv1[2], conv1[3]))
                darknet.append(make_block(next(keys), conv1[1], conv2[1],
                                          conv2[0], conv2[2], conv2[3]))
                cin = conv2[1]

    kf1, kf2, kf3, kf4 = jax.random.split(next(keys), 4)
    d_in = 1024 * S * S
    d_out = S * S * (C + B * 5)
    w1 = (jax.random.normal(kf1, (d_in, fcl_size), jnp.float32)
          * jnp.sqrt(1.0 / d_in)).astype(jnp.bfloat16)
    b1 = 0.01 * jax.random.normal(kf2, (fcl_size,), jnp.float32)
    w2 = (jax.random.normal(kf3, (fcl_size, d_out), jnp.float32)
          * jnp.sqrt(1.0 / fcl_size)).astype(jnp.bfloat16)
    b2 = 0.01 * jax.random.normal(kf4, (d_out,), jnp.float32)
    return dict(darknet=darknet, fc=(w1, b1, w2, b2))


# ----------------------------------------------------------------------------
# Forward pass (mirrors YOLOv1.forward)
# ----------------------------------------------------------------------------
def yolov1_forward(x_nchw, params):
    # NCHW (PyTorch) -> NHWC (kernel layout), bf16 activations inside the net.
    x = jnp.transpose(x_nchw, (0, 2, 3, 1)).astype(jnp.bfloat16)
    for layer in params['darknet']:
        if layer['type'] == 'conv':
            x = conv_bn_leaky(x, layer['w'], layer['bias'],
                              layer['ksize'], layer['stride'], layer['padding'])
        else:
            x = maxpool2x2(x)
    N, H, W, C = x.shape
    if H == 1 and W == 1:
        flat = x.reshape(N, C)     # torch.flatten on NCHW == NHWC when spatial=1x1
    else:
        flat = jnp.transpose(x, (0, 3, 1, 2)).reshape(N, -1)
    w1, b1, w2, b2 = params['fc']
    # Linear -> Dropout (inference-mode identity) -> LeakyReLU(0.1)
    h = fused_matmul(flat, w1, b1, leaky=True, out_dtype=jnp.bfloat16)
    # Final Linear (no activation), f32 output
    out = fused_matmul(h, w2, b2, leaky=False, out_dtype=jnp.float32)
    return out


if __name__ == "__main__":
    key = jax.random.PRNGKey(0)
    kp, kx = jax.random.split(key)
    S, B, C = 1, 2, 3
    params = init_yolo_params(kp, in_channels=3, split_size=S, num_boxes=B,
                              num_classes=C, fcl_size=256)
    # Input spatial must be 64*S for the backbone's /64 downsampling; S=1 -> 64x64.
    x = jax.random.normal(kx, (2, 3, 64, 64), jnp.float32)  # NCHW, like PyTorch
    out = yolov1_forward(x, params)
    out = jax.block_until_ready(out)
    assert out.shape == (2, S * S * (C + B * 5)), out.shape
    assert bool(jnp.all(jnp.isfinite(out)))
    print("KERNEL_OK")
</pallas_src>

<mosaic_0001>
module attributes {stable_mosaic.version = 11 : i64} {
  func.func @_matmul_kernel(%arg0: i32, %arg1: i32, %arg2: i32, %arg3: memref<512x147xbf16, #tpu.memory_space<vmem>>, %arg4: memref<147x64xbf16, #tpu.memory_space<vmem>>, %arg5: memref<1x64xf32, #tpu.memory_space<vmem>>, %arg6: memref<512x64xbf16, #tpu.memory_space<vmem>>, %arg7: memref<512x64xf32, #tpu.memory_space<vmem>>) attributes {dimension_semantics = [#tpu.dimension_semantics<parallel>, #tpu.dimension_semantics<parallel>, #tpu.dimension_semantics<arbitrary>], iteration_bounds = array<i64: 4, 1, 1>, scalar_prefetch = 0 : i64, scratch_operands = 1 : i64, tpu.core_type = #tpu.core_type<tc>, window_params = [{transform_indices = @transform_0, window_bounds = array<i64: 512, 147>}, {transform_indices = @transform_1, window_bounds = array<i64: 147, 64>}, {transform_indices = @transform_2, window_bounds = array<i64: 1, 64>}, {transform_indices = @transform_3, window_bounds = array<i64: 512, 64>}]} {
    %c0_i32 = arith.constant 0 : i32
    %0 = arith.cmpi eq, %arg2, %c0_i32 : i32
    %1 = arith.extui %0 : i1 to i32
    %c0_i32_0 = arith.constant 0 : i32
    %2 = arith.cmpi ne, %1, %c0_i32_0 : i32
    scf.if %2 {
      %cst_10 = arith.constant 0.000000e+00 : f32
      %12 = vector.broadcast %cst_10 : f32 to vector<512x64xf32>
      %c0_11 = arith.constant 0 : index
      %c0_12 = arith.constant 0 : index
      %13 = vector.load %arg7[%c0_11, %c0_12] : memref<512x64xf32, #tpu.memory_space<vmem>>, vector<512x64xf32>
      tpu.vector_store %arg7[%c0_11, %c0_12], %12 {strides = array<i32>} : memref<512x64xf32, #tpu.memory_space<vmem>>, vector<512x64xf32>,
    } else {
    }
    %c0 = arith.constant 0 : index
    %c0_1 = arith.constant 0 : index
    %3 = vector.load %arg7[%c0, %c0_1] : memref<512x64xf32, #tpu.memory_space<vmem>>, vector<512x64xf32>
    %c0_2 = arith.constant 0 : index
    %c0_3 = arith.constant 0 : index
    %4 = vector.load %arg3[%c0_2, %c0_3] : memref<512x147xbf16, #tpu.memory_space<vmem>>, vector<512x147xbf16>
    %c0_4 = arith.constant 0 : index
    %c0_5 = arith.constant 0 : index
    %5 = vector.load %arg4[%c0_4, %c0_5] : memref<147x64xbf16, #tpu.memory_space<vmem>>, vector<147x64xbf16>
    %cst = arith.constant dense<0.000000e+00> : vector<512x64xf32>
    %6 = tpu.matmul %4, %5, %cst {dimension_numbers = #tpu.dot_dimension_numbers<[1], [0], [0], [1], [0, 0, 1, 1], [], []>} : vector<512x147xbf16>, vector<147x64xbf16>, vector<512x64xf32> -> vector<512x64xf32>
    %7 = arith.addf %3, %6 : vector<512x64xf32>
    %c0_6 = arith.constant 0 : index
    %c0_7 = arith.constant 0 : index
    %8 = vector.load %arg7[%c0_6, %c0_7] : memref<512x64xf32, #tpu.memory_space<vmem>>, vector<512x64xf32>
    tpu.vector_store %arg7[%c0_6, %c0_7], %7 {strides = array<i32>} : memref<512x64xf32, #tpu.memory_space<vmem>>, vector<512x64xf32>,
    %c0_i32_8 = arith.constant 0 : i32
    %9 = arith.cmpi eq, %arg2, %c0_i32_8 : i32
    %10 = arith.extui %9 : i1 to i32
    %c0_i32_9 = arith.constant 0 : i32
    %11 = arith.cmpi ne, %10, %c0_i32_9 : i32
    scf.if %11 {
      %c0_10 = arith.constant 0 : index
      %c0_11 = arith.constant 0 : index
      %12 = vector.load %arg7[%c0_10, %c0_11] : memref<512x64xf32, #tpu.memory_space<vmem>>, vector<512x64xf32>
      %c0_12 = arith.constant 0 : index
      %c0_13 = arith.constant 0 : index
      %13 = vector.load %arg5[%c0_12, %c0_13] : memref<1x64xf32, #tpu.memory_space<vmem>>, vector<1x64xf32>
      %14 = vector.broadcast %13 : vector<1x64xf32> to vector<512x64xf32>
      %15 = arith.addf %12, %14 : vector<512x64xf32>
      %cst_14 = arith.constant 0.000000e+00 : f32
      %16 = vector.broadcast %cst_14 : f32 to vector<512x64xf32>
      %17 = arith.cmpf ogt, %15, %16 : vector<512x64xf32>
      %cst_15 = arith.constant 1.000000e-01 : f32
      %18 = vector.broadcast %cst_15 : f32 to vector<512x64xf32>
      %19 = arith.mulf %18, %15 : vector<512x64xf32>
      %20 = arith.select %17, %15, %19 : vector<512x64xi1>, vector<512x64xf32>
      %21 = arith.truncf %20 : vector<512x64xf32> to vector<512x64xbf16>
      %c0_16 = arith.constant 0 : index
      %c0_17 = arith.constant 0 : index
      %22 = vector.load %arg6[%c0_16, %c0_17] : memref<512x64xbf16, #tpu.memory_space<vmem>>, vector<512x64xbf16>
      tpu.vector_store %arg6[%c0_16, %c0_17], %21 {strides = array<i32>} : memref<512x64xbf16, #tpu.memory_space<vmem>>, vector<512x64xbf16>,
    } else {
    }
    return
  }
  func.func @transform_0(%arg0: i32, %arg1: i32, %arg2: i32) -> (i32, i32) {
    %c0_i32 = arith.constant 0 : i32
    return %arg0, %arg2 : i32, i32
  }
  func.func @transform_1(%arg0: i32, %arg1: i32, %arg2: i32) -> (i32, i32) {
    %c0_i32 = arith.constant 0 : i32
    return %arg2, %arg1 : i32, i32
  }
  func.func @transform_2(%arg0: i32, %arg1: i32, %arg2: i32) -> (i32, i32) {
    %c0_i32 = arith.constant 0 : i32
    %c0_i32_0 = arith.constant 0 : i32
    return %c0_i32, %arg1 : i32, i32
  }
  func.func @transform_3(%arg0: i32, %arg1: i32, %arg2: i32) -> (i32, i32) {
    %c0_i32 = arith.constant 0 : i32
    return %arg0, %arg1 : i32, i32
  }
}

</mosaic_0001>

<llo_original>
// kernel: tpu_custom_call.1
$region0: #{tpu_custom_call.1}
  #allocation0 [shape = 'u32[]', space=smem, size = 0x4, offset = 0x4, fixed_abs, tag = 'smem constant byte address 0x4 - core index']
  #allocation1 [shape = 'u32[72,128]{1,0:T(1,128)}', space=vmem, size = 0x9000, scoped, tag = 'internal scratch']
  #allocation2 [shape = 'f32[512,64]{1,0:T(8,128)}', space=vmem, size = 0x40000, scoped, tag = 'scratch operand']
  %s0 = inlined_call_operand.vmem [shape: bf16[2048,147], index: 0, kind: input, shape index: {}]
  %s1 = inlined_call_operand.vmem [shape: bf16[147,64], index: 1, kind: input, shape index: {}]
  %s2 = inlined_call_operand.vmem [shape: f32[1,64], index: 2, kind: input, shape index: {}]
  %s3 = inlined_call_operand.vmem [shape: bf16[2048,64], index: 3, kind: output, shape index: {}]
  %s4 = sld [smem:[#allocation0]]
  $region53: #{tpu_custom_call.1} parent=0
    _
  %s6 = ssub.s32 1, %s4
  %s7 = scalar_select 0, %s6, %s4
  loop: start=0, step=1, limit=6
  $region2: #{tpu_custom_call.1} parent=0 // loop_pre_header
    _
  $region3: #{tpu_custom_call.1} parent=0 // loop_header
    %s9 = sphi 0, %s13
    %p10 = scmp.ge.s32.totalorder %s9, 6
    %s16 = sphi 0, %s35
    %s17 = sphi 0, %s31
    %s18 = sphi 0, %s27
    %s19 = sphi 0, %s16
    %s20 = sphi 0, %s17
    %s21 = sphi 0, %s18
    %s22 = sphi 0, %s19
    %s23 = sphi 0, %s20
    %s24 = sphi 0, %s21
    %s40 = sphi 0, %s42
    %s43 = sphi 0, %s40
    %s44 = sphi 0, %s43
    %s60 = sphi 0, %s44
    %s68 = sphi 0, %s70
    %s71 = sphi 0, %s68
    %s72 = sphi 0, %s71
    %s88 = sphi 0, %s72
    %s94 = sphi 0, %s96
    %s97 = sphi 0, %s94
    %s98 = sphi 0, %s97
    %s114 = sphi 0, %s98
    %s122 = sphi 0, %s124
    %s125 = sphi 0, %s122
    %s126 = sphi 0, %s125
    %s142 = sphi 0, %s126
  $region4: #{tpu_custom_call.1} parent=0 // loop_header_branch
    %12 = sbr.rel (%p10) target = $region8
  $region5: #{tpu_custom_call.1} parent=0 // loop_body
    %s14 = ssub.s32 %s9, 1
    %s15 = ssub.s32 %s9, 2
    %s25 = sadd.s32 1, %s18
    %p26 = scmp.ge.s32.totalorder %s25, 1
    %s27 = scalar_select %p26, 0, %s25
    %s28 = sadd.s32 1, %s17
    %s29 = scalar_select %p26, %s28, %s17
    %p30 = scmp.ge.s32.totalorder %s29, 1
    %s31 = scalar_select %p30, 0, %s29
    %s32 = sadd.s32 1, %s16
    %s33 = scalar_select %p30, %s32, %s16
    %p34 = scmp.ge.s32.totalorder %s33, 4
    %s35 = scalar_select %p34, 0, %s33
    %s36 = ssub.s32 %s16, %s35
    %s37 = ssub.s32 %s18, %s27
    %s38 = sor.u32 %s36, %s37
    %p39 = scmp.eq.s32.totalorder %s38, 0
    %s41 = sadd.s32 %s40, 1
    %s42 = scalar_select %p39, %s40, %s41
    %p45 = pneg %p39
    %p46 = scmp.eq.s32.totalorder %s9, 3
    %p47 = por %p45, %p46
    %p48 = scmp.ne.s32.totalorder %s40, %s43
    %p49 = scmp.eq.s32.totalorder %s9, 0
    %p50 = por %p48, %p49
    %p51 = scmp.ne.s32.totalorder %s40, %s43
    %p52 = scmp.eq.s32.totalorder %s14, 3
    %p53 = por %p51, %p52
    %p54 = scmp.ne.s32.totalorder %s43, %s44
    %p55 = scmp.eq.s32.totalorder %s14, 0
    %p56 = por %p54, %p55
    %p57 = scmp.ne.s32.totalorder %s43, %s44
    %p58 = scmp.eq.s32.totalorder %s15, 3
    %p59 = por %p57, %p58
    %p61 = scmp.ne.s32.totalorder %s44, %s60
    %p62 = scmp.eq.s32.totalorder %s15, 0
    %p63 = por %p61, %p62
    %s64 = ssub.s32 %s18, %s27
    %s65 = ssub.s32 %s17, %s31
    %s66 = sor.u32 %s64, %s65
    %p67 = scmp.eq.s32.totalorder %s66, 0
    %s69 = sadd.s32 %s68, 1
    %s70 = scalar_select %p67, %s68, %s69
    %p73 = pneg %p67
    %p74 = scmp.eq.s32.totalorder %s9, 3
    %p75 = por %p73, %p74
    %p76 = scmp.ne.s32.totalorder %s68, %s71
    %p77 = scmp.eq.s32.totalorder %s9, 0
    %p78 = por %p76, %p77
    %p79 = scmp.ne.s32.totalorder %s68, %s71
    %p80 = scmp.eq.s32.totalorder %s14, 3
    %p81 = por %p79, %p80
    %p82 = scmp.ne.s32.totalorder %s71, %s72
    %p83 = scmp.eq.s32.totalorder %s14, 0
    %p84 = por %p82, %p83
    %p85 = scmp.ne.s32.totalorder %s71, %s72
    %p86 = scmp.eq.s32.totalorder %s15, 3
    %p87 = por %p85, %p86
    %p89 = scmp.ne.s32.totalorder %s72, %s88
    %p90 = scmp.eq.s32.totalorder %s15, 0
    %p91 = por %p89, %p90
    %s92 = ssub.s32 %s17, %s31
    %p93 = scmp.eq.s32.totalorder %s92, 0
    %s95 = sadd.s32 %s94, 1
    %s96 = scalar_select %p93, %s94, %s95
    %p99 = pneg %p93
    %p100 = scmp.eq.s32.totalorder %s9, 3
    %p101 = por %p99, %p100
    %p102 = scmp.ne.s32.totalorder %s94, %s97
    %p103 = scmp.eq.s32.totalorder %s9, 0
    %p104 = por %p102, %p103
    %p105 = scmp.ne.s32.totalorder %s94, %s97
    %p106 = scmp.eq.s32.totalorder %s14, 3
    %p107 = por %p105, %p106
    %p108 = scmp.ne.s32.totalorder %s97, %s98
    %p109 = scmp.eq.s32.totalorder %s14, 0
    %p110 = por %p108, %p109
    %p111 = scmp.ne.s32.totalorder %s97, %s98
    %p112 = scmp.eq.s32.totalorder %s15, 3
    %p113 = por %p111, %p112
    %p115 = scmp.ne.s32.totalorder %s98, %s114
    %p116 = scmp.eq.s32.totalorder %s15, 0
    %p117 = por %p115, %p116
    %s118 = ssub.s32 %s16, %s35
    %s119 = ssub.s32 %s17, %s31
    %s120 = sor.u32 %s118, %s119
    %p121 = scmp.eq.s32.totalorder %s120, 0
    %s123 = sadd.s32 %s122, 1
    %s124 = scalar_select %p121, %s122, %s123
    %p127 = pneg %p121
    %p128 = scmp.eq.s32.totalorder %s9, 3
    %p129 = por %p127, %p128
    %p130 = scmp.ne.s32.totalorder %s122, %s125
    %p131 = scmp.eq.s32.totalorder %s9, 0
    %p132 = por %p130, %p131
    %p133 = scmp.ne.s32.totalorder %s122, %s125
    %p134 = scmp.eq.s32.totalorder %s14, 3
    %p135 = por %p133, %p134
    %p136 = scmp.ne.s32.totalorder %s125, %s126
    %p137 = scmp.eq.s32.totalorder %s14, 0
    %p138 = por %p136, %p137
    %p139 = scmp.ne.s32.totalorder %s125, %s126
    %p140 = scmp.eq.s32.totalorder %s15, 3
    %p141 = por %p139, %p140
    %p143 = scmp.ne.s32.totalorder %s126, %s142
    %p144 = scmp.eq.s32.totalorder %s15, 0
    %p145 = por %p143, %p144
    %p146 = scmp.le.s32.totalorder 1, %s9
    %p147 = scmp.lt.s32.totalorder %s9, 5
    %p148 = pnand %p146, %p147
    %p149 = pneg %p148
    // Predicated region
    $region9: #{tpu_custom_call.1} parent=5 // pred_check
      _
    $region10: #{tpu_custom_call.1} parent=5 // pred_check_branch
      %151 = sbr.rel (%p148) target = $region12
    $region11: #{tpu_custom_call.1} parent=5 // pred_region
      %s152 = ssub.s32 %s9, 1
      // Predicated region
      $region13: #{tpu_custom_call.1} parent=11 // pred_check
        %p153 = pneg %p84
      $region14: #{tpu_custom_call.1} parent=11 // pred_check_branch
        %155 = sbr.rel (%p153) target = $region16
      $region15: #{tpu_custom_call.1} parent=11 // pred_region
        %s156 = smul.u32 19, %s21
        %p157 = scmp.lt.s32.totalorder %s156, 18
        %s158 = scalar_select %p157, %s156, 18
        %p159 = scmp.lt.s32.totalorder %s20, 0
        %s160 = scalar_select %p159, %s20, 0
        %s161 = sadd.s32 %s160, %s158
        %s162 = smul.addr %s161, 4
        %s163 = scalar_lea.vmem %s1, %s162
        %s164 = smul.u32 19, %s21
      $region16: #{tpu_custom_call.1} parent=11 // pred_fallthru
        _
      // Predicated region
      $region17: #{tpu_custom_call.1} parent=11 // pred_check
        %p165 = pneg %p110
      $region18: #{tpu_custom_call.1} parent=11 // pred_check_branch
        %167 = sbr.rel (%p165) target = $region20
      $region19: #{tpu_custom_call.1} parent=11 // pred_region
        %p168 = scmp.lt.s32.totalorder %s20, 0
        %s169 = scalar_select %p168, %s20, 0
        %s170 = scalar_lea.vmem %s2, %s169
      $region20: #{tpu_custom_call.1} parent=11 // pred_fallthru
        _
    $region12: #{tpu_custom_call.1} parent=5 // pred_fallthru
      _
    %p171 = scmp.lt.s32.totalorder %s9, 4
    // Predicated region
    $region21: #{tpu_custom_call.1} parent=5 // pred_check
      %p172 = pneg %p171
    $region22: #{tpu_custom_call.1} parent=5 // pred_check_branch
      %174 = sbr.rel (%p172) target = $region24
    $region23: #{tpu_custom_call.1} parent=5 // pred_region
      // Predicated region
      $region25: #{tpu_custom_call.1} parent=23 // pred_check
        %p175 = pneg %p50
      $region26: #{tpu_custom_call.1} parent=23 // pred_check_branch
        %177 = sbr.rel (%p175) target = $region28
      $region27: #{tpu_custom_call.1} parent=23 // pred_region
        %s178 = smul.u32 64, %s16
        %s179 = smul.u32 2, %s18
        %p180 = scmp.lt.s32.totalorder %s178, 255
        %s181 = scalar_select %p180, %s178, 255
        %p182 = scmp.lt.s32.totalorder %s179, 1
        %s183 = scalar_select %p182, %s179, 1
        %s184 = smul.addr %s181, 2
        %s185 = sadd.s32 %s183, %s184
        %s186 = smul.addr %s185, 4
        %s187 = scalar_lea.vmem %s0, %s186
        %s188 = smul.u32 64, %s16
        %s189 = smul.u32 2, %s18
      $region28: #{tpu_custom_call.1} parent=23 // pred_fallthru
        _
    $region24: #{tpu_custom_call.1} parent=5 // pred_fallthru
      _
    %p190 = scmp.le.s32.totalorder 1, %s9
    %p191 = scmp.lt.s32.totalorder %s9, 5
    %p192 = pnand %p190, %p191
    %p193 = pneg %p192
    // Predicated region
    $region29: #{tpu_custom_call.1} parent=5 // pred_check
      _
    $region30: #{tpu_custom_call.1} parent=5 // pred_check_branch
      %195 = sbr.rel (%p192) target = $region32
    $region31: #{tpu_custom_call.1} parent=5 // pred_region
      %s196 = ssub.s32 %s9, 1
      %s197 = smul.u32 64, %s19
      %s198 = smul.u32 2, %s21
      %p199 = scmp.lt.s32.totalorder %s197, 255
      %s200 = scalar_select %p199, %s197, 255
      %p201 = scmp.lt.s32.totalorder %s198, 1
      %s202 = scalar_select %p201, %s198, 1
      %s203 = smul.addr %s200, 2
      %s204 = sadd.s32 %s202, %s203
      %s205 = smul.addr %s204, 4
      %s206 = scalar_lea.vmem %s0, %s205
      %p207 = pneg %p56
      %p208 = pneg %p53
      %s209 = smul.u32 19, %s21
      %p210 = scmp.lt.s32.totalorder %s209, 18
      %s211 = scalar_select %p210, %s209, 18
      %p212 = scmp.lt.s32.totalorder %s20, 0
      %s213 = scalar_select %p212, %s20, 0
      %s214 = sadd.s32 %s213, %s211
      %s215 = smul.addr %s214, 4
      %s216 = scalar_lea.vmem %s1, %s215
      %p217 = pneg %p84
      %p218 = pneg %p81
      %p219 = scmp.lt.s32.totalorder %s20, 0
      %s220 = scalar_select %p219, %s20, 0
      %s221 = scalar_lea.vmem %s2, %s220
      %p222 = pneg %p110
      %p223 = pneg %p107
      %p224 = pneg %p138
      %p225 = pneg %p135
      %s226 = smul.u32 64, %s19
      %p227 = scmp.lt.s32.totalorder %s226, 255
      %s228 = scalar_select %p227, %s226, 255
      %p229 = scmp.lt.s32.totalorder %s20, 0
      %s230 = scalar_select %p229, %s20, 0
      %s231 = sadd.s32 %s230, %s228
      %s232 = smul.addr %s231, 4
      %s233 = scalar_lea.vmem %s3, %s232
      %s234 = smul.u32 64, %s19
      %s235 = smul.u32 2, %s21
      %p236 = scmp.lt.s32.totalorder %s234, 255
      %s237 = scalar_select %p236, %s234, 255
      %p238 = scmp.lt.s32.totalorder %s235, 1
      %s239 = scalar_select %p238, %s235, 1
      %s240 = smul.addr %s237, 2
      %s241 = sadd.s32 %s239, %s240
      %s242 = smul.addr %s241, 4
      %s243 = scalar_lea.vmem %s0, %s242
      %s244 = smul.u32 64, %s19
      %s245 = smul.u32 2, %s21
      %s246 = smul.u32 19, %s21
      %p247 = scmp.lt.s32.totalorder %s246, 18
      %s248 = scalar_select %p247, %s246, 18
      %p249 = scmp.lt.s32.totalorder %s20, 0
      %s250 = scalar_select %p249, %s20, 0
      %s251 = sadd.s32 %s250, %s248
      %s252 = smul.addr %s251, 4
      %s253 = scalar_lea.vmem %s1, %s252
      %s254 = smul.u32 19, %s21
      %p255 = scmp.lt.s32.totalorder %s20, 0
      %s256 = scalar_select %p255, %s20, 0
      %s257 = scalar_lea.vmem %s2, %s256
      %s258 = smul.u32 64, %s19
      %p259 = scmp.lt.s32.totalorder %s258, 255
      %s260 = scalar_select %p259, %s258, 255
      %p261 = scmp.lt.s32.totalorder %s20, 0
      %s262 = scalar_select %p261, %s20, 0
      %s263 = sadd.s32 %s262, %s260
      %s264 = smul.addr %s263, 4
      %s265 = scalar_lea.vmem %s3, %s264
      %s266 = smul.u32 64, %s19
      %p268 = scmp.eq.s32.totalorder %s21, 0
      // Predicated region
      $region33: #{tpu_custom_call.1} parent=31 // pred_check
        %p269 = pneg %p268
      $region34: #{tpu_custom_call.1} parent=31 // pred_check_branch
        %271 = sbr.rel (%p269) target = $region36
      $region35: #{tpu_custom_call.1} parent=31 // pred_region
        %vm272 = vcmask 523264
        %273 = vst.msk [vmem:[#allocation2] sm:$0xff] %vm272, 0.0
        %274 = vst.msk [vmem:[#allocation2 + $0x8] sm:$0xff] %vm272, 0.0
        %275 = vst.msk [vmem:[#allocation2 + $0x10] sm:$0xff] %vm272, 0.0
        %276 = vst.msk [vmem:[#allocation2 + $0x18] sm:$0xff] %vm272, 0.0
        %277 = vst.msk [vmem:[#allocation2 + $0x20] sm:$0xff] %vm272, 0.0
        %278 = vst.msk [vmem:[#allocation2 + $0x28] sm:$0xff] %vm272, 0.0
        %279 = vst.msk [vmem:[#allocation2 + $0x30] sm:$0xff] %vm272, 0.0
        %280 = vst.msk [vmem:[#allocation2 + $0x38] sm:$0xff] %vm272, 0.0
        %281 = vst.msk [vmem:[#allocation2 + $0x40] sm:$0xff] %vm272, 0.0
        %282 = vst.msk [vmem:[#allocation2 + $0x48] sm:$0xff] %vm272, 0.0
        %283 = vst.msk [vmem:[#allocation2 + $0x50] sm:$0xff] %vm272, 0.0
        %284 = vst.msk [vmem:[#allocation2 + $0x58] sm:$0xff] %vm272, 0.0
        %285 = vst.msk [vmem:[#allocation2 + $0x60] sm:$0xff] %vm272, 0.0
        %286 = vst.msk [vmem:[#allocation2 + $0x68] sm:$0xff] %vm272, 0.0
        %287 = vst.msk [vmem:[#allocation2 + $0x70] sm:$0xff] %vm272, 0.0
        %288 = vst.msk [vmem:[#allocation2 + $0x78] sm:$0xff] %vm272, 0.0
        %289 = vst.msk [vmem:[#allocation2 + $0x80] sm:$0xff] %vm272, 0.0
        %290 = vst.msk [vmem:[#allocation2 + $0x88] sm:$0xff] %vm272, 0.0
        %291 = vst.msk [vmem:[#allocation2 + $0x90] sm:$0xff] %vm272, 0.0
        %292 = vst.msk [vmem:[#allocation2 + $0x98] sm:$0xff] %vm272, 0.0
        %293 = vst.msk [vmem:[#allocation2 + $0xa0] sm:$0xff] %vm272, 0.0
        %294 = vst.msk [vmem:[#allocation2 + $0xa8] sm:$0xff] %vm272, 0.0
        %295 = vst.msk [vmem:[#allocation2 + $0xb0] sm:$0xff] %vm272, 0.0
        %296 = vst.msk [vmem:[#allocation2 + $0xb8] sm:$0xff] %vm272, 0.0
        %297 = vst.msk [vmem:[#allocation2 + $0xc0] sm:$0xff] %vm272, 0.0
        %298 = vst.msk [vmem:[#allocation2 + $0xc8] sm:$0xff] %vm272, 0.0
        %299 = vst.msk [vmem:[#allocation2 + $0xd0] sm:$0xff] %vm272, 0.0
        %300 = vst.msk [vmem:[#allocation2 + $0xd8] sm:$0xff] %vm272, 0.0
        %301 = vst.msk [vmem:[#allocation2 + $0xe0] sm:$0xff] %vm272, 0.0
        %302 = vst.msk [vmem:[#allocation2 + $0xe8] sm:$0xff] %vm272, 0.0
        %303 = vst.msk [vmem:[#allocation2 + $0xf0] sm:$0xff] %vm272, 0.0
        %304 = vst.msk [vmem:[#allocation2 + $0xf8] sm:$0xff] %vm272, 0.0
        %305 = vst.msk [vmem:[#allocation2 + $0x100] sm:$0xff] %vm272, 0.0
        %306 = vst.msk [vmem:[#allocation2 + $0x108] sm:$0xff] %vm272, 0.0
        %307 = vst.msk [vmem:[#allocation2 + $0x110] sm:$0xff] %vm272, 0.0
        %308 = vst.msk [vmem:[#allocation2 + $0x118] sm:$0xff] %vm272, 0.0
        %309 = vst.msk [vmem:[#allocation2 + $0x120] sm:$0xff] %vm272, 0.0
        %310 = vst.msk [vmem:[#allocation2 + $0x128] sm:$0xff] %vm272, 0.0
        %311 = vst.msk [vmem:[#allocation2 + $0x130] sm:$0xff] %vm272, 0.0
        %312 = vst.msk [vmem:[#allocation2 + $0x138] sm:$0xff] %vm272, 0.0
        %313 = vst.msk [vmem:[#allocation2 + $0x140] sm:$0xff] %vm272, 0.0
        %314 = vst.msk [vmem:[#allocation2 + $0x148] sm:$0xff] %vm272, 0.0
        %315 = vst.msk [vmem:[#allocation2 + $0x150] sm:$0xff] %vm272, 0.0
        %316 = vst.msk [vmem:[#allocation2 + $0x158] sm:$0xff] %vm272, 0.0
        %317 = vst.msk [vmem:[#allocation2 + $0x160] sm:$0xff] %vm272, 0.0
        %318 = vst.msk [vmem:[#allocation2 + $0x168] sm:$0xff] %vm272, 0.0
        %319 = vst.msk [vmem:[#allocation2 + $0x170] sm:$0xff] %vm272, 0.0
        %320 = vst.msk [vmem:[#allocation2 + $0x178] sm:$0xff] %vm272, 0.0
        %321 = vst.msk [vmem:[#allocation2 + $0x180] sm:$0xff] %vm272, 0.0
        %322 = vst.msk [vmem:[#allocation2 + $0x188] sm:$0xff] %vm272, 0.0
        %323 = vst.msk [vmem:[#allocation2 + $0x190] sm:$0xff] %vm272, 0.0
        %324 = vst.msk [vmem:[#allocation2 + $0x198] sm:$0xff] %vm272, 0.0
        %325 = vst.msk [vmem:[#allocation2 + $0x1a0] sm:$0xff] %vm272, 0.0
        %326 = vst.msk [vmem:[#allocation2 + $0x1a8] sm:$0xff] %vm272, 0.0
        %327 = vst.msk [vmem:[#allocation2 + $0x1b0] sm:$0xff] %vm272, 0.0
        %328 = vst.msk [vmem:[#allocation2 + $0x1b8] sm:$0xff] %vm272, 0.0
        %329 = vst.msk [vmem:[#allocation2 + $0x1c0] sm:$0xff] %vm272, 0.0
        %330 = vst.msk [vmem:[#allocation2 + $0x1c8] sm:$0xff] %vm272, 0.0
        %331 = vst.msk [vmem:[#allocation2 + $0x1d0] sm:$0xff] %vm272, 0.0
        %332 = vst.msk [vmem:[#allocation2 + $0x1d8] sm:$0xff] %vm272, 0.0
        %333 = vst.msk [vmem:[#allocation2 + $0x1e0] sm:$0xff] %vm272, 0.0
        %334 = vst.msk [vmem:[#allocation2 + $0x1e8] sm:$0xff] %vm272, 0.0
        %335 = vst.msk [vmem:[#allocation2 + $0x1f0] sm:$0xff] %vm272, 0.0
        %336 = vst.msk [vmem:[#allocation2 + $0x1f8] sm:$0xff] %vm272, 0.0
      $region36: #{tpu_custom_call.1} parent=31 // pred_fallthru
        _
      %v337 = vld [vmem:[#allocation2] sm:$0xff]
      %v338 = vld [vmem:[#allocation2 + $0x8] sm:$0xff]
      %v339 = vld [vmem:[#allocation2 + $0x10] sm:$0xff]
      %v340 = vld [vmem:[#allocation2 + $0x18] sm:$0xff]
      %v341 = vld [vmem:[#allocation2 + $0x20] sm:$0xff]
      %v342 = vld [vmem:[#allocation2 + $0x28] sm:$0xff]
      %v343 = vld [vmem:[#allocation2 + $0x30] sm:$0xff]
      %v344 = vld [vmem:[#allocation2 + $0x38] sm:$0xff]
      %v345 = vld [vmem:[#allocation2 + $0x40] sm:$0xff]
      %v346 = vld [vmem:[#allocation2 + $0x48] sm:$0xff]
      %v347 = vld [vmem:[#allocation2 + $0x50] sm:$0xff]
      %v348 = vld [vmem:[#allocation2 + $0x58] sm:$0xff]
      %v349 = vld [vmem:[#allocation2 + $0x60] sm:$0xff]
      %v350 = vld [vmem:[#allocation2 + $0x68] sm:$0xff]
      %v351 = vld [vmem:[#allocation2 + $0x70] sm:$0xff]
      %v352 = vld [vmem:[#allocation2 + $0x78] sm:$0xff]
      %v353 = vld [vmem:[#allocation2 + $0x80] sm:$0xff]
      %v354 = vld [vmem:[#allocation2 + $0x88] sm:$0xff]
      %v355 = vld [vmem:[#allocation2 + $0x90] sm:$0xff]
      %v356 = vld [vmem:[#allocation2 + $0x98] sm:$0xff]
      %v357 = vld [vmem:[#allocation2 + $0xa0] sm:$0xff]
      %v358 = vld [vmem:[#allocation2 + $0xa8] sm:$0xff]
      %v359 = vld [vmem:[#allocation2 + $0xb0] sm:$0xff]
      %v360 = vld [vmem:[#allocation2 + $0xb8] sm:$0xff]
      %v361 = vld [vmem:[#allocation2 + $0xc0] sm:$0xff]
      %v362 = vld [vmem:[#allocation2 + $0xc8] sm:$0xff]
      %v363 = vld [vmem:[#allocation2 + $0xd0] sm:$0xff]
      %v364 = vld [vmem:[#allocation2 + $0xd8] sm:$0xff]
      %v365 = vld [vmem:[#allocation2 + $0xe0] sm:$0xff]
      %v366 = vld [vmem:[#allocation2 + $0xe8] sm:$0xff]
      %v367 = vld [vmem:[#allocation2 + $0xf0] sm:$0xff]
      %v368 = vld [vmem:[#allocation2 + $0xf8] sm:$0xff]
      %v369 = vld [vmem:[#allocation2 + $0x100] sm:$0xff]
      %v370 = vld [vmem:[#allocation2 + $0x108] sm:$0xff]
      %v371 = vld [vmem:[#allocation2 + $0x110] sm:$0xff]
      %v372 = vld [vmem:[#allocation2 + $0x118] sm:$0xff]
      %v373 = vld [vmem:[#allocation2 + $0x120] sm:$0xff]
      %v374 = vld [vmem:[#allocation2 + $0x128] sm:$0xff]
      %v375 = vld [vmem:[#allocation2 + $0x130] sm:$0xff]
      %v376 = vld [vmem:[#allocation2 + $0x138] sm:$0xff]
      %v377 = vld [vmem:[#allocation2 + $0x140] sm:$0xff]
      %v378 = vld [vmem:[#allocation2 + $0x148] sm:$0xff]
      %v379 = vld [vmem:[#allocation2 + $0x150] sm:$0xff]
      %v380 = vld [vmem:[#allocation2 + $0x158] sm:$0xff]
      %v381 = vld [vmem:[#allocation2 + $0x160] sm:$0xff]
      %v382 = vld [vmem:[#allocation2 + $0x168] sm:$0xff]
      %v383 = vld [vmem:[#allocation2 + $0x170] sm:$0xff]
      %v384 = vld [vmem:[#allocation2 + $0x178] sm:$0xff]
      %v385 = vld [vmem:[#allocation2 + $0x180] sm:$0xff]
      %v386 = vld [vmem:[#allocation2 + $0x188] sm:$0xff]
      %v387 = vld [vmem:[#allocation2 + $0x190] sm:$0xff]
      %v388 = vld [vmem:[#allocation2 + $0x198] sm:$0xff]
      %v389 = vld [vmem:[#allocation2 + $0x1a0] sm:$0xff]
      %v390 = vld [vmem:[#allocation2 + $0x1a8] sm:$0xff]
      %v391 = vld [vmem:[#allocation2 + $0x1b0] sm:$0xff]
      %v392 = vld [vmem:[#allocation2 + $0x1b8] sm:$0xff]
      %v393 = vld [vmem:[#allocation2 + $0x1c0] sm:$0xff]
      %v394 = vld [vmem:[#allocation2 + $0x1c8] sm:$0xff]
      %v395 = vld [vmem:[#allocation2 + $0x1d0] sm:$0xff]
      %v396 = vld [vmem:[#allocation2 + $0x1d8] sm:$0xff]
      %v397 = vld [vmem:[#allocation2 + $0x1e0] sm:$0xff]
      %v398 = vld [vmem:[#allocation2 + $0x1e8] sm:$0xff]
      %v399 = vld [vmem:[#allocation2 + $0x1f0] sm:$0xff]
      %v400 = vld [vmem:[#allocation2 + $0x1f8] sm:$0xff]
      %v401 = vld [vmem:[%s243] sm:$0xff]
      %v402 = vld [vmem:[%s243 + $0x8] sm:$0xff]
      %v403 = vld [vmem:[%s243 + $0x10] sm:$0xff]
      %v404 = vld [vmem:[%s243 + $0x18] sm:$0xff]
      %v405 = vld [vmem:[%s243 + $0x20] sm:$0xff]
      %v406 = vld [vmem:[%s243 + $0x28] sm:$0xff]
      %v407 = vld [vmem:[%s243 + $0x30] sm:$0xff]
      %v408 = vld [vmem:[%s243 + $0x38] sm:$0xff]
      %v409 = vld [vmem:[%s243 + $0x40] sm:$0xff]
      %v410 = vld [vmem:[%s243 + $0x48] sm:$0xff]
      %v411 = vld [vmem:[%s243 + $0x50] sm:$0xff]
      %v412 = vld [vmem:[%s243 + $0x58] sm:$0xff]
      %v413 = vld [vmem:[%s243 + $0x60] sm:$0xff]
      %v414 = vld [vmem:[%s243 + $0x68] sm:$0xff]
      %v415 = vld [vmem:[%s243 + $0x70] sm:$0xff]
      %v416 = vld [vmem:[%s243 + $0x78] sm:$0xff]
      %v417 = vld [vmem:[%s243 + $0x80] sm:$0xff]
      %v418 = vld [vmem:[%s243 + $0x88] sm:$0xff]
      %v419 = vld [vmem:[%s243 + $0x90] sm:$0xff]
      %v420 = vld [vmem:[%s243 + $0x98] sm:$0xff]
      %v421 = vld [vmem:[%s243 + $0xa0] sm:$0xff]
      %v422 = vld [vmem:[%s243 + $0xa8] sm:$0xff]
      %v423 = vld [vmem:[%s243 + $0xb0] sm:$0xff]
      %v424 = vld [vmem:[%s243 + $0xb8] sm:$0xff]
      %v425 = vld [vmem:[%s243 + $0xc0] sm:$0xff]
      %v426 = vld [vmem:[%s243 + $0xc8] sm:$0xff]
      %v427 = vld [vmem:[%s243 + $0xd0] sm:$0xff]
      %v428 = vld [vmem:[%s243 + $0xd8] sm:$0xff]
      %v429 = vld [vmem:[%s243 + $0xe0] sm:$0xff]
      %v430 = vld [vmem:[%s243 + $0xe8] sm:$0xff]
      %v431 = vld [vmem:[%s243 + $0xf0] sm:$0xff]
      %v432 = vld [vmem:[%s243 + $0xf8] sm:$0xff]
      %v433 = vld [vmem:[%s243 + $0x100] sm:$0xff]
      %v434 = vld [vmem:[%s243 + $0x108] sm:$0xff]
      %v435 = vld [vmem:[%s243 + $0x110] sm:$0xff]
      %v436 = vld [vmem:[%s243 + $0x118] sm:$0xff]
      %v437 = vld [vmem:[%s243 + $0x120] sm:$0xff]
      %v438 = vld [vmem:[%s243 + $0x128] sm:$0xff]
      %v439 = vld [vmem:[%s243 + $0x130] sm:$0xff]
      %v440 = vld [vmem:[%s243 + $0x138] sm:$0xff]
      %v441 = vld [vmem:[%s243 + $0x140] sm:$0xff]
      %v442 = vld [vmem:[%s243 + $0x148] sm:$0xff]
      %v443 = vld [vmem:[%s243 + $0x150] sm:$0xff]
      %v444 = vld [vmem:[%s243 + $0x158] sm:$0xff]
      %v445 = vld [vmem:[%s243 + $0x160] sm:$0xff]
      %v446 = vld [vmem:[%s243 + $0x168] sm:$0xff]
      %v447 = vld [vmem:[%s243 + $0x170] sm:$0xff]
      %v448 = vld [vmem:[%s243 + $0x178] sm:$0xff]
      %v449 = vld [vmem:[%s243 + $0x180] sm:$0xff]
      %v450 = vld [vmem:[%s243 + $0x188] sm:$0xff]
      %v451 = vld [vmem:[%s243 + $0x190] sm:$0xff]
      %v452 = vld [vmem:[%s243 + $0x198] sm:$0xff]
      %v453 = vld [vmem:[%s243 + $0x1a0] sm:$0xff]
      %v454 = vld [vmem:[%s243 + $0x1a8] sm:$0xff]
      %v455 = vld [vmem:[%s243 + $0x1b0] sm:$0xff]
      %v456 = vld [vmem:[%s243 + $0x1b8] sm:$0xff]
      %v457 = vld [vmem:[%s243 + $0x1c0] sm:$0xff]
      %v458 = vld [vmem:[%s243 + $0x1c8] sm:$0xff]
      %v459 = vld [vmem:[%s243 + $0x1d0] sm:$0xff]
      %v460 = vld [vmem:[%s243 + $0x1d8] sm:$0xff]
      %v461 = vld [vmem:[%s243 + $0x1e0] sm:$0xff]
      %v462 = vld [vmem:[%s243 + $0x1e8] sm:$0xff]
      %v463 = vld [vmem:[%s243 + $0x1f0] sm:$0xff]
      %v464 = vld [vmem:[%s243 + $0x1f8] sm:$0xff]
      %v465 = vld [vmem:[%s253] sm:$0xf]
      %v466 = vld [vmem:[%s253 + $0x4] sm:$0xf]
      %v467 = vld [vmem:[%s253 + $0x8] sm:$0xf]
      %v468 = vld [vmem:[%s253 + $0xc] sm:$0xf]
      %v469 = vld [vmem:[%s253 + $0x10] sm:$0xf]
      %v470 = vld [vmem:[%s253 + $0x14] sm:$0xf]
      %v471 = vld [vmem:[%s253 + $0x18] sm:$0xf]
      %v472 = vld [vmem:[%s253 + $0x1c] sm:$0xf]
      %v473 = vld [vmem:[%s253 + $0x20] sm:$0xf]
      %v474 = vld [vmem:[%s253 + $0x24] sm:$0xf]
      %v475 = vld [vmem:[%s253 + $0x28] sm:$0xf]
      %v476 = vld [vmem:[%s253 + $0x2c] sm:$0xf]
      %v477 = vld [vmem:[%s253 + $0x30] sm:$0xf]
      %v478 = vld [vmem:[%s253 + $0x34] sm:$0xf]
      %v479 = vld [vmem:[%s253 + $0x38] sm:$0xf]
      %v480 = vld [vmem:[%s253 + $0x3c] sm:$0xf]
      %v481 = vld [vmem:[%s253 + $0x40] sm:$0xf]
      %v482 = vld [vmem:[%s253 + $0x44] sm:$0xf]
      %v483 = vld [vmem:[%s253 + $0x48] sm:$0x3]
      %v548 = vunpack.c.l.b16 %v401
      %v549 = vunpack.c.h.b16 %v401
      %v550 = vunpack.c.l.b16 %v402
      %v551 = vunpack.c.h.b16 %v402
      %v552 = vunpack.c.l.b16 %v403
      %v553 = vunpack.c.h.b16 %v403
      %v554 = vunpack.c.l.b16 %v404
      %v555 = vunpack.c.h.b16 %v404
      %v556 = vunpack.c.l.b16 %v405
      %v557 = vunpack.c.h.b16 %v405
      %v558 = vunpack.c.l.b16 %v406
      %v559 = vunpack.c.h.b16 %v406
      %v560 = vunpack.c.l.b16 %v407
      %v561 = vunpack.c.h.b16 %v407
      %v562 = vunpack.c.l.b16 %v408
      %v563 = vunpack.c.h.b16 %v408
      %v564 = vunpack.c.l.b16 %v409
      %v565 = vunpack.c.h.b16 %v409
      %v566 = vunpack.c.l.b16 %v410
      %v567 = vunpack.c.h.b16 %v410
      %v568 = vunpack.c.l.b16 %v411
      %v569 = vunpack.c.h.b16 %v411
      %v570 = vunpack.c.l.b16 %v412
      %v571 = vunpack.c.h.b16 %v412
      %v572 = vunpack.c.l.b16 %v413
      %v573 = vunpack.c.h.b16 %v413
      %v574 = vunpack.c.l.b16 %v414
      %v575 = vunpack.c.h.b16 %v414
      %v576 = vunpack.c.l.b16 %v415
      %v577 = vunpack.c.h.b16 %v415
      %v578 = vunpack.c.l.b16 %v416
      %v579 = vunpack.c.h.b16 %v416
      %v580 = vunpack.c.l.b16 %v417
      %v581 = vunpack.c.h.b16 %v417
      %v582 = vunpack.c.l.b16 %v418
      %v583 = vunpack.c.h.b16 %v418
      %v584 = vunpack.c.l.b16 %v419
      %v585 = vunpack.c.h.b16 %v419
      %v586 = vunpack.c.l.b16 %v420
      %v587 = vunpack.c.h.b16 %v420
      %v588 = vunpack.c.l.b16 %v421
      %v589 = vunpack.c.h.b16 %v421
      %v590 = vunpack.c.l.b16 %v422
      %v591 = vunpack.c.h.b16 %v422
      %v592 = vunpack.c.l.b16 %v423
      %v593 = vunpack.c.h.b16 %v423
      %v594 = vunpack.c.l.b16 %v424
      %v595 = vunpack.c.h.b16 %v424
      %v596 = vunpack.c.l.b16 %v425
      %v597 = vunpack.c.h.b16 %v425
      %v598 = vunpack.c.l.b16 %v426
      %v599 = vunpack.c.h.b16 %v426
      %v600 = vunpack.c.l.b16 %v427
      %v601 = vunpack.c.h.b16 %v427
      %v602 = vunpack.c.l.b16 %v428
      %v603 = vunpack.c.h.b16 %v428
      %v604 = vunpack.c.l.b16 %v429
      %v605 = vunpack.c.h.b16 %v429
      %v606 = vunpack.c.l.b16 %v430
      %v607 = vunpack.c.h.b16 %v430
      %v608 = vunpack.c.l.b16 %v431
      %v609 = vunpack.c.h.b16 %v431
      %v610 = vunpack.c.l.b16 %v432
      %v611 = vunpack.c.h.b16 %v432
      %v612 = vunpack.c.l.b16 %v433
      %v613 = vunpack.c.h.b16 %v433
      %v614 = vunpack.c.l.b16 %v434
      %v615 = vunpack.c.h.b16 %v434
      %v616 = vunpack.c.l.b16 %v435
      %v617 = vunpack.c.h.b16 %v435
      %v618 = vunpack.c.l.b16 %v436
      %v619 = vunpack.c.h.b16 %v436
      %v620 = vunpack.c.l.b16 %v437
      %v621 = vunpack.c.h.b16 %v437
      %v622 = vunpack.c.l.b16 %v438
      %v623 = vunpack.c.h.b16 %v438
      %v624 = vunpack.c.l.b16 %v439
      %v625 = vunpack.c.h.b16 %v439
      %v626 = vunpack.c.l.b16 %v440
      %v627 = vunpack.c.h.b16 %v440
      %v628 = vunpack.c.l.b16 %v441
      %v629 = vunpack.c.h.b16 %v441
      %v630 = vunpack.c.l.b16 %v442
      %v631 = vunpack.c.h.b16 %v442
      %v632 = vunpack.c.l.b16 %v443
      %v633 = vunpack.c.h.b16 %v443
      %v634 = vunpack.c.l.b16 %v444
      %v635 = vunpack.c.h.b16 %v444
      %v636 = vunpack.c.l.b16 %v445
      %v637 = vunpack.c.h.b16 %v445
      %v638 = vunpack.c.l.b16 %v446
      %v639 = vunpack.c.h.b16 %v446
      %v640 = vunpack.c.l.b16 %v447
      %v641 = vunpack.c.h.b16 %v447
      %v642 = vunpack.c.l.b16 %v448
      %v643 = vunpack.c.h.b16 %v448
      %v644 = vunpack.c.l.b16 %v449
      %v645 = vunpack.c.h.b16 %v449
      %v646 = vunpack.c.l.b16 %v450
      %v647 = vunpack.c.h.b16 %v450
      %v648 = vunpack.c.l.b16 %v451
      %v649 = vunpack.c.h.b16 %v451
      %v650 = vunpack.c.l.b16 %v452
      %v651 = vunpack.c.h.b16 %v452
      %v652 = vunpack.c.l.b16 %v453
      %v653 = vunpack.c.h.b16 %v453
      %v654 = vunpack.c.l.b16 %v454
      %v655 = vunpack.c.h.b16 %v454
      %v656 = vunpack.c.l.b16 %v455
      %v657 = vunpack.c.h.b16 %v455
      %v658 = vunpack.c.l.b16 %v456
      %v659 = vunpack.c.h.b16 %v456
      %v660 = vunpack.c.l.b16 %v457
      %v661 = vunpack.c.h.b16 %v457
      %v662 = vunpack.c.l.b16 %v458
      %v663 = vunpack.c.h.b16 %v458
      %v664 = vunpack.c.l.b16 %v459
      %v665 = vunpack.c.h.b16 %v459
      %v666 = vunpack.c.l.b16 %v460
      %v667 = vunpack.c.h.b16 %v460
      %v668 = vunpack.c.l.b16 %v461
      %v669 = vunpack.c.h.b16 %v461
      %v670 = vunpack.c.l.b16 %v462
      %v671 = vunpack.c.h.b16 %v462
      %v672 = vunpack.c.l.b16 %v463
      %v673 = vunpack.c.h.b16 %v463
      %v674 = vunpack.c.l.b16 %v464
      %v675 = vunpack.c.h.b16 %v464
      %v676 = vpack.c.b16 %v550, %v548
      %v677 = vpack.c.b16 %v551, %v549
      %v678 = vpack.c.b16 %v554, %v552
      %v679 = vpack.c.b16 %v555, %v553
      %v680 = vpack.c.b16 %v558, %v556
      %v681 = vpack.c.b16 %v559, %v557
      %v682 = vpack.c.b16 %v562, %v560
      %v683 = vpack.c.b16 %v563, %v561
      %v684 = vpack.c.b16 %v566, %v564
      %v685 = vpack.c.b16 %v567, %v565
      %v686 = vpack.c.b16 %v570, %v568
      %v687 = vpack.c.b16 %v571, %v569
      %v688 = vpack.c.b16 %v574, %v572
      %v689 = vpack.c.b16 %v575, %v573
      %v690 = vpack.c.b16 %v578, %v576
      %v691 = vpack.c.b16 %v579, %v577
      %v692 = vpack.c.b16 %v582, %v580
      %v693 = vpack.c.b16 %v583, %v581
      %v694 = vpack.c.b16 %v586, %v584
      %v695 = vpack.c.b16 %v587, %v585
      %v696 = vpack.c.b16 %v590, %v588
      %v697 = vpack.c.b16 %v591, %v589
      %v698 = vpack.c.b16 %v594, %v592
      %v699 = vpack.c.b16 %v595, %v593
      %v700 = vpack.c.b16 %v598, %v596
      %v701 = vpack.c.b16 %v599, %v597
      %v702 = vpack.c.b16 %v602, %v600
      %v703 = vpack.c.b16 %v603, %v601
      %v704 = vpack.c.b16 %v606, %v604
      %v705 = vpack.c.b16 %v607, %v605
      %v706 = vpack.c.b16 %v610, %v608
      %v707 = vpack.c.b16 %v611, %v609
      %v708 = vpack.c.b16 %v614, %v612
      %v709 = vpack.c.b16 %v615, %v613
      %v710 = vpack.c.b16 %v618, %v616
      %v711 = vpack.c.b16 %v619, %v617
      %v712 = vpack.c.b16 %v622, %v620
      %v713 = vpack.c.b16 %v623, %v621
      %v714 = vpack.c.b16 %v626, %v624
      %v715 = vpack.c.b16 %v627, %v625
      %v716 = vpack.c.b16 %v630, %v628
      %v717 = vpack.c.b16 %v631, %v629
      %v718 = vpack.c.b16 %v634, %v632
      %v719 = vpack.c.b16 %v635, %v633
      %v720 = vpack.c.b16 %v638, %v636
      %v721 = vpack.c.b16 %v639, %v637
      %v722 = vpack.c.b16 %v642, %v640
      %v723 = vpack.c.b16 %v643, %v641
      %v724 = vpack.c.b16 %v646, %v644
      %v725 = vpack.c.b16 %v647, %v645
      %v726 = vpack.c.b16 %v650, %v648
      %v727 = vpack.c.b16 %v651, %v649
      %v728 = vpack.c.b16 %v654, %v652
      %v729 = vpack.c.b16 %v655, %v653
      %v730 = vpack.c.b16 %v658, %v656
      %v731 = vpack.c.b16 %v659, %v657
      %v732 = vpack.c.b16 %v662, %v660
      %v733 = vpack.c.b16 %v663, %v661
      %v734 = vpack.c.b16 %v666, %v664
      %v735 = vpack.c.b16 %v667, %v665
      %v736 = vpack.c.b16 %v670, %v668
      %v737 = vpack.c.b16 %v671, %v669
      %v738 = vpack.c.b16 %v674, %v672
      %v739 = vpack.c.b16 %v675, %v673
      %v791 = vunpack.c.l.b16 %v465
      %v792 = vunpack.c.l.b16 %v466
      %v793 = vunpack.c.l.b16 %v467
      %v794 = vunpack.c.l.b16 %v468
      %v795 = vunpack.c.l.b16 %v469
      %v796 = vunpack.c.l.b16 %v470
      %v797 = vunpack.c.l.b16 %v471
      %v798 = vunpack.c.l.b16 %v472
      %v799 = vunpack.c.l.b16 %v473
      %v800 = vunpack.c.l.b16 %v474
      %v801 = vunpack.c.l.b16 %v475
      %v802 = vunpack.c.l.b16 %v476
      %v803 = vunpack.c.l.b16 %v477
      %v804 = vunpack.c.l.b16 %v478
      %v805 = vunpack.c.l.b16 %v479
      %v806 = vunpack.c.l.b16 %v480
      %v807 = vunpack.c.l.b16 %v481
      %v808 = vunpack.c.l.b16 %v482
      %v809 = vunpack.c.l.b16 %v483
      %v810 = vpack.c.b16 %v792, %v791
      %v811 = vpack.c.b16 %v794, %v793
      %v812 = vpack.c.b16 %v796, %v795
      %v813 = vpack.c.b16 %v798, %v797
      %v814 = vpack.c.b16 %v800, %v799
      %v815 = vpack.c.b16 %v802, %v801
      %v816 = vpack.c.b16 %v804, %v803
      %v817 = vpack.c.b16 %v806, %v805
      %v818 = vpack.c.b16 %v808, %v807
      %v819 = vpack.c.b16 %v809, %v809
      %vm829 = vcmask 154624
      %v831 = vsel %vm829, %v677, 0
      %v834 = vsel %vm829, %v679, 0
      %v837 = vsel %vm829, %v681, 0
      %v840 = vsel %vm829, %v683, 0
      %v843 = vsel %vm829, %v685, 0
      %v846 = vsel %vm829, %v687, 0
      %v849 = vsel %vm829, %v689, 0
      %v852 = vsel %vm829, %v691, 0
      %v855 = vsel %vm829, %v693, 0
      %v858 = vsel %vm829, %v695, 0
      %v861 = vsel %vm829, %v697, 0
      %v864 = vsel %vm829, %v699, 0
      %v867 = vsel %vm829, %v701, 0
      %v870 = vsel %vm829, %v703, 0
      %v873 = vsel %vm829, %v705, 0
      %v876 = vsel %vm829, %v707, 0
      %v879 = vsel %vm829, %v709, 0
      %v882 = vsel %vm829, %v711, 0
      %v885 = vsel %vm829, %v713, 0
      %v888 = vsel %vm829, %v715, 0
      %v891 = vsel %vm829, %v717, 0
      %v894 = vsel %vm829, %v719, 0
      %v897 = vsel %vm829, %v721, 0
      %v900 = vsel %vm829, %v723, 0
      %v903 = vsel %vm829, %v725, 0
      %v906 = vsel %vm829, %v727, 0
      %v909 = vsel %vm829, %v729, 0
      %v912 = vsel %vm829, %v731, 0
      %v915 = vsel %vm829, %v733, 0
      %v918 = vsel %vm829, %v735, 0
      %v921 = vsel %vm829, %v737, 0
      %v924 = vsel %vm829, %v739, 0
      %vm926 = vcmask 1040384
      %vm927 = vcmask 1041408
      %v928 = vsel %vm926, 4294967295, 65535
      %v929 = vsel %vm927, %v928, 0
      %v931 = vand.u32 %v819, %v929
      %933 = vmatpush.bf16.msra.mxu0 %v817
      %934 = vmatpush.bf16.msra.mxu0 %v816
      %935 = vmatpush.bf16.msra.mxu0 %v815
      %936 = vmatpush.bf16.msra.mxu0 %v814
      %937 = vmatpush.bf16.msra.mxu0 %v813
      %938 = vmatpush.bf16.msra.mxu0 %v812
      %939 = vmatpush.bf16.msra.mxu0 %v811
      %940 = vmatpush.bf16.msra.mxu0 %v810
      %941 = vmatmul.bf16.gmra.mxu0 %v676
      %v942 = vpop.f32.mrf.mxu0
      %v943 = vadd.f32 0.0, %v942
      %v944 = vpop.f32.mrf.mxu0
      %v945 = vadd.f32 0.0, %v944
      %946 = vmatmul.bf16.gmra.mxu0 %v678
      %v947 = vpop.f32.mrf.mxu0
      %v948 = vadd.f32 0.0, %v947
      %v949 = vpop.f32.mrf.mxu0
      %v950 = vadd.f32 0.0, %v949
      %951 = vmatmul.bf16.gmra.mxu0 %v680
      %v952 = vpop.f32.mrf.mxu0
      %v953 = vadd.f32 0.0, %v952
      %v954 = vpop.f32.mrf.mxu0
      %v955 = vadd.f32 0.0, %v954
      %956 = vmatmul.bf16.gmra.mxu0 %v682
      %v957 = vpop.f32.mrf.mxu0
      %v958 = vadd.f32 0.0, %v957
      %v959 = vpop.f32.mrf.mxu0
      %v960 = vadd.f32 0.0, %v959
      %961 = vmatmul.bf16.gmra.mxu0 %v684
      %v962 = vpop.f32.mrf.mxu0
      %v963 = vadd.f32 0.0, %v962
      %v964 = vpop.f32.mrf.mxu0
      %v965 = vadd.f32 0.0, %v964
      %966 = vmatmul.bf16.gmra.mxu0 %v686
      %v967 = vpop.f32.mrf.mxu0
      %v968 = vadd.f32 0.0, %v967
      %v969 = vpop.f32.mrf.mxu0
      %v970 = vadd.f32 0.0, %v969
      %971 = vmatmul.bf16.gmra.mxu0 %v688
      %v972 = vpop.f32.mrf.mxu0
      %v973 = vadd.f32 0.0, %v972
      %v974 = vpop.f32.mrf.mxu0
      %v975 = vadd.f32 0.0, %v974
      %976 = vmatmul.bf16.gmra.mxu0 %v690
      %v977 = vpop.f32.mrf.mxu0
      %v978 = vadd.f32 0.0, %v977
      %v979 = vpop.f32.mrf.mxu0
      %v980 = vadd.f32 0.0, %v979
      %981 = vmatmul.bf16.gmra.mxu0 %v692
      %v982 = vpop.f32.mrf.mxu0
      %v983 = vadd.f32 0.0, %v982
      %v984 = vpop.f32.mrf.mxu0
      %v985 = vadd.f32 0.0, %v984
      %986 = vmatmul.bf16.gmra.mxu0 %v694
      %v987 = vpop.f32.mrf.mxu0
      %v988 = vadd.f32 0.0, %v987
      %v989 = vpop.f32.mrf.mxu0
      %v990 = vadd.f32 0.0, %v989
      %991 = vmatmul.bf16.gmra.mxu0 %v696
      %v992 = vpop.f32.mrf.mxu0
      %v993 = vadd.f32 0.0, %v992
      %v994 = vpop.f32.mrf.mxu0
      %v995 = vadd.f32 0.0, %v994
      %996 = vmatmul.bf16.gmra.mxu0 %v698
      %v997 = vpop.f32.mrf.mxu0
      %v998 = vadd.f32 0.0, %v997
      %v999 = vpop.f32.mrf.mxu0
      %v1000 = vadd.f32 0.0, %v999
      %1001 = vmatmul.bf16.gmra.mxu0 %v700
      %v1002 = vpop.f32.mrf.mxu0
      %v1003 = vadd.f32 0.0, %v1002
      %v1004 = vpop.f32.mrf.mxu0
      %v1005 = vadd.f32 0.0, %v1004
      %1006 = vmatmul.bf16.gmra.mxu0 %v702
      %v1007 = vpop.f32.mrf.mxu0
      %v1008 = vadd.f32 0.0, %v1007
      %v1009 = vpop.f32.mrf.mxu0
      %v1010 = vadd.f32 0.0, %v1009
      %1011 = vmatmul.bf16.gmra.mxu0 %v704
      %v1012 = vpop.f32.mrf.mxu0
      %v1013 = vadd.f32 0.0, %v1012
      %v1014 = vpop.f32.mrf.mxu0
      %v1015 = vadd.f32 0.0, %v1014
      %1016 = vmatmul.bf16.gmra.mxu0 %v706
      %v1017 = vpop.f32.mrf.mxu0
      %v1018 = vadd.f32 0.0, %v1017
      %v1019 = vpop.f32.mrf.mxu0
      %v1020 = vadd.f32 0.0, %v1019
      %1021 = vmatmul.bf16.gmra.mxu0 %v708
      %v1022 = vpop.f32.mrf.mxu0
      %v1023 = vadd.f32 0.0, %v1022
      %v1024 = vpop.f32.mrf.mxu0
      %v1025 = vadd.f32 0.0, %v1024
      %1026 = vmatmul.bf16.gmra.mxu0 %v710
      %v1027 = vpop.f32.mrf.mxu0
      %v1028 = vadd.f32 0.0, %v1027
      %v1029 = vpop.f32.mrf.mxu0
      %v1030 = vadd.f32 0.0, %v1029
      %1031 = vmatmul.bf16.gmra.mxu0 %v712
      %v1032 = vpop.f32.mrf.mxu0
      %v1033 = vadd.f32 0.0, %v1032
      %v1034 = vpop.f32.mrf.mxu0
      %v1035 = vadd.f32 0.0, %v1034
      %1036 = vmatmul.bf16.gmra.mxu0 %v714
      %v1037 = vpop.f32.mrf.mxu0
      %v1038 = vadd.f32 0.0, %v1037
      %v1039 = vpop.f32.mrf.mxu0
      %v1040 = vadd.f32 0.0, %v1039
      %1041 = vmatmul.bf16.gmra.mxu0 %v716
      %v1042 = vpop.f32.mrf.mxu0
      %v1043 = vadd.f32 0.0, %v1042
      %v1044 = vpop.f32.mrf.mxu0
      %v1045 = vadd.f32 0.0, %v1044
      %1046 = vmatmul.bf16.gmra.mxu0 %v718
      %v1047 = vpop.f32.mrf.mxu0
      %v1048 = vadd.f32 0.0, %v1047
      %v1049 = vpop.f32.mrf.mxu0
      %v1050 = vadd.f32 0.0, %v1049
      %1051 = vmatmul.bf16.gmra.mxu0 %v720
      %v1052 = vpop.f32.mrf.mxu0
      %v1053 = vadd.f32 0.0, %v1052
      %v1054 = vpop.f32.mrf.mxu0
      %v1055 = vadd.f32 0.0, %v1054
      %1056 = vmatmul.bf16.gmra.mxu0 %v722
      %v1057 = vpop.f32.mrf.mxu0
      %v1058 = vadd.f32 0.0, %v1057
      %v1059 = vpop.f32.mrf.mxu0
      %v1060 = vadd.f32 0.0, %v1059
      %1061 = vmatmul.bf16.gmra.mxu0 %v724
      %v1062 = vpop.f32.mrf.mxu0
      %v1063 = vadd.f32 0.0, %v1062
      %v1064 = vpop.f32.mrf.mxu0
      %v1065 = vadd.f32 0.0, %v1064
      %1066 = vmatmul.bf16.gmra.mxu0 %v726
      %v1067 = vpop.f32.mrf.mxu0
      %v1068 = vadd.f32 0.0, %v1067
      %v1069 = vpop.f32.mrf.mxu0
      %v1070 = vadd.f32 0.0, %v1069
      %1071 = vmatmul.bf16.gmra.mxu0 %v728
      %v1072 = vpop.f32.mrf.mxu0
      %v1073 = vadd.f32 0.0, %v1072
      %v1074 = vpop.f32.mrf.mxu0
      %v1075 = vadd.f32 0.0, %v1074
      %1076 = vmatmul.bf16.gmra.mxu0 %v730
      %v1077 = vpop.f32.mrf.mxu0
      %v1078 = vadd.f32 0.0, %v1077
      %v1079 = vpop.f32.mrf.mxu0
      %v1080 = vadd.f32 0.0, %v1079
      %1081 = vmatmul.bf16.gmra.mxu0 %v732
      %v1082 = vpop.f32.mrf.mxu0
      %v1083 = vadd.f32 0.0, %v1082
      %v1084 = vpop.f32.mrf.mxu0
      %v1085 = vadd.f32 0.0, %v1084
      %1086 = vmatmul.bf16.gmra.mxu0 %v734
      %v1087 = vpop.f32.mrf.mxu0
      %v1088 = vadd.f32 0.0, %v1087
      %v1089 = vpop.f32.mrf.mxu0
      %v1090 = vadd.f32 0.0, %v1089
      %1091 = vmatmul.bf16.gmra.mxu0 %v736
      %v1092 = vpop.f32.mrf.mxu0
      %v1093 = vadd.f32 0.0, %v1092
      %v1094 = vpop.f32.mrf.mxu0
      %v1095 = vadd.f32 0.0, %v1094
      %1096 = vmatmul.bf16.gmra.mxu0 %v738
      %v1097 = vpop.f32.mrf.mxu0
      %v1098 = vadd.f32 0.0, %v1097
      %v1099 = vpop.f32.mrf.mxu0
      %v1100 = vadd.f32 0.0, %v1099
      %1101 = vdwg.mxu0
      %1102 = vmatpush.bf16.msra.mxu0 0
      %1103 = vmatpush.bf16.msra.mxu0 0
      %1104 = vmatpush.bf16.msra.mxu0 0
      %1105 = vmatpush.bf16.msra.mxu0 0
      %1106 = vmatpush.bf16.msra.mxu0 0
      %1107 = vmatpush.bf16.msra.mxu0 0
      %1108 = vmatpush.bf16.msra.mxu0 %v931
      %1109 = vmatpush.bf16.msra.mxu0 %v818
      %1110 = vmatmul.bf16.gmra.mxu0 %v831
      %v1111 = vpop.f32.mrf.mxu0
      %v1112 = vadd.f32 %v943, %v1111
      %v1113 = vpop.f32.mrf.mxu0
      %v1114 = vadd.f32 %v945, %v1113
      %1115 = vmatmul.bf16.gmra.mxu0 %v834
      %v1116 = vpop.f32.mrf.mxu0
      %v1117 = vadd.f32 %v948, %v1116
      %v1118 = vpop.f32.mrf.mxu0
      %v1119 = vadd.f32 %v950, %v1118
      %1120 = vmatmul.bf16.gmra.mxu0 %v837
      %v1121 = vpop.f32.mrf.mxu0
      %v1122 = vadd.f32 %v953, %v1121
      %v1123 = vpop.f32.mrf.mxu0
      %v1124 = vadd.f32 %v955, %v1123
      %1125 = vmatmul.bf16.gmra.mxu0 %v840
      %v1126 = vpop.f32.mrf.mxu0
      %v1127 = vadd.f32 %v958, %v1126
      %v1128 = vpop.f32.mrf.mxu0
      %v1129 = vadd.f32 %v960, %v1128
      %1130 = vmatmul.bf16.gmra.mxu0 %v843
      %v1131 = vpop.f32.mrf.mxu0
      %v1132 = vadd.f32 %v963, %v1131
      %v1133 = vpop.f32.mrf.mxu0
      %v1134 = vadd.f32 %v965, %v1133
      %1135 = vmatmul.bf16.gmra.mxu0 %v846
      %v1136 = vpop.f32.mrf.mxu0
      %v1137 = vadd.f32 %v968, %v1136
      %v1138 = vpop.f32.mrf.mxu0
      %v1139 = vadd.f32 %v970, %v1138
      %1140 = vmatmul.bf16.gmra.mxu0 %v849
      %v1141 = vpop.f32.mrf.mxu0
      %v1142 = vadd.f32 %v973, %v1141
      %v1143 = vpop.f32.mrf.mxu0
      %v1144 = vadd.f32 %v975, %v1143
      %1145 = vmatmul.bf16.gmra.mxu0 %v852
      %v1146 = vpop.f32.mrf.mxu0
      %v1147 = vadd.f32 %v978, %v1146
      %v1148 = vpop.f32.mrf.mxu0
      %v1149 = vadd.f32 %v980, %v1148
      %1150 = vmatmul.bf16.gmra.mxu0 %v855
      %v1151 = vpop.f32.mrf.mxu0
      %v1152 = vadd.f32 %v983, %v1151
      %v1153 = vpop.f32.mrf.mxu0
      %v1154 = vadd.f32 %v985, %v1153
      %1155 = vmatmul.bf16.gmra.mxu0 %v858
      %v1156 = vpop.f32.mrf.mxu0
      %v1157 = vadd.f32 %v988, %v1156
      %v1158 = vpop.f32.mrf.mxu0
      %v1159 = vadd.f32 %v990, %v1158
      %1160 = vmatmul.bf16.gmra.mxu0 %v861
      %v1161 = vpop.f32.mrf.mxu0
      %v1162 = vadd.f32 %v993, %v1161
      %v1163 = vpop.f32.mrf.mxu0
      %v1164 = vadd.f32 %v995, %v1163
      %1165 = vmatmul.bf16.gmra.mxu0 %v864
      %v1166 = vpop.f32.mrf.mxu0
      %v1167 = vadd.f32 %v998, %v1166
      %v1168 = vpop.f32.mrf.mxu0
      %v1169 = vadd.f32 %v1000, %v1168
      %1170 = vmatmul.bf16.gmra.mxu0 %v867
      %v1171 = vpop.f32.mrf.mxu0
      %v1172 = vadd.f32 %v1003, %v1171
      %v1173 = vpop.f32.mrf.mxu0
      %v1174 = vadd.f32 %v1005, %v1173
      %1175 = vmatmul.bf16.gmra.mxu0 %v870
      %v1176 = vpop.f32.mrf.mxu0
      %v1177 = vadd.f32 %v1008, %v1176
      %v1178 = vpop.f32.mrf.mxu0
      %v1179 = vadd.f32 %v1010, %v1178
      %1180 = vmatmul.bf16.gmra.mxu0 %v873
      %v1181 = vpop.f32.mrf.mxu0
      %v1182 = vadd.f32 %v1013, %v1181
      %v1183 = vpop.f32.mrf.mxu0
      %v1184 = vadd.f32 %v1015, %v1183
      %1185 = vmatmul.bf16.gmra.mxu0 %v876
      %v1186 = vpop.f32.mrf.mxu0
      %v1187 = vadd.f32 %v1018, %v1186
      %v1188 = vpop.f32.mrf.mxu0
      %v1189 = vadd.f32 %v1020, %v1188
      %1190 = vmatmul.bf16.gmra.mxu0 %v879
      %v1191 = vpop.f32.mrf.mxu0
      %v1192 = vadd.f32 %v1023, %v1191
      %v1193 = vpop.f32.mrf.mxu0
      %v1194 = vadd.f32 %v1025, %v1193
      %1195 = vmatmul.bf16.gmra.mxu0 %v882
      %v1196 = vpop.f32.mrf.mxu0
      %v1197 = vadd.f32 %v1028, %v1196
      %v1198 = vpop.f32.mrf.mxu0
      %v1199 = vadd.f32 %v1030, %v1198
      %1200 = vmatmul.bf16.gmra.mxu0 %v885
      %v1201 = vpop.f32.mrf.mxu0
      %v1202 = vadd.f32 %v1033, %v1201
      %v1203 = vpop.f32.mrf.mxu0
      %v1204 = vadd.f32 %v1035, %v1203
      %1205 = vmatmul.bf16.gmra.mxu0 %v888
      %v1206 = vpop.f32.mrf.mxu0
      %v1207 = vadd.f32 %v1038, %v1206
      %v1208 = vpop.f32.mrf.mxu0
      %v1209 = vadd.f32 %v1040, %v1208
      %1210 = vmatmul.bf16.gmra.mxu0 %v891
      %v1211 = vpop.f32.mrf.mxu0
      %v1212 = vadd.f32 %v1043, %v1211
      %v1213 = vpop.f32.mrf.mxu0
      %v1214 = vadd.f32 %v1045, %v1213
      %1215 = vmatmul.bf16.gmra.mxu0 %v894
      %v1216 = vpop.f32.mrf.mxu0
      %v1217 = vadd.f32 %v1048, %v1216
      %v1218 = vpop.f32.mrf.mxu0
      %v1219 = vadd.f32 %v1050, %v1218
      %1220 = vmatmul.bf16.gmra.mxu0 %v897
      %v1221 = vpop.f32.mrf.mxu0
      %v1222 = vadd.f32 %v1053, %v1221
      %v1223 = vpop.f32.mrf.mxu0
      %v1224 = vadd.f32 %v1055, %v1223
      %1225 = vmatmul.bf16.gmra.mxu0 %v900
      %v1226 = vpop.f32.mrf.mxu0
      %v1227 = vadd.f32 %v1058, %v1226
      %v1228 = vpop.f32.mrf.mxu0
      %v1229 = vadd.f32 %v1060, %v1228
      %1230 = vmatmul.bf16.gmra.mxu0 %v903
      %v1231 = vpop.f32.mrf.mxu0
      %v1232 = vadd.f32 %v1063, %v1231
      %v1233 = vpop.f32.mrf.mxu0
      %v1234 = vadd.f32 %v1065, %v1233
      %1235 = vmatmul.bf16.gmra.mxu0 %v906
      %v1236 = vpop.f32.mrf.mxu0
      %v1237 = vadd.f32 %v1068, %v1236
      %v1238 = vpop.f32.mrf.mxu0
      %v1239 = vadd.f32 %v1070, %v1238
      %1240 = vmatmul.bf16.gmra.mxu0 %v909
      %v1241 = vpop.f32.mrf.mxu0
      %v1242 = vadd.f32 %v1073, %v1241
      %v1243 = vpop.f32.mrf.mxu0
      %v1244 = vadd.f32 %v1075, %v1243
      %1245 = vmatmul.bf16.gmra.mxu0 %v912
      %v1246 = vpop.f32.mrf.mxu0
      %v1247 = vadd.f32 %v1078, %v1246
      %v1248 = vpop.f32.mrf.mxu0
      %v1249 = vadd.f32 %v1080, %v1248
      %1250 = vmatmul.bf16.gmra.mxu0 %v915
      %v1251 = vpop.f32.mrf.mxu0
      %v1252 = vadd.f32 %v1083, %v1251
      %v1253 = vpop.f32.mrf.mxu0
      %v1254 = vadd.f32 %v1085, %v1253
      %1255 = vmatmul.bf16.gmra.mxu0 %v918
      %v1256 = vpop.f32.mrf.mxu0
      %v1257 = vadd.f32 %v1088, %v1256
      %v1258 = vpop.f32.mrf.mxu0
      %v1259 = vadd.f32 %v1090, %v1258
      %1260 = vmatmul.bf16.gmra.mxu0 %v921
      %v1261 = vpop.f32.mrf.mxu0
      %v1262 = vadd.f32 %v1093, %v1261
      %v1263 = vpop.f32.mrf.mxu0
      %v1264 = vadd.f32 %v1095, %v1263
      %1265 = vmatmul.bf16.gmra.mxu0 %v924
      %v1266 = vpop.f32.mrf.mxu0
      %v1267 = vadd.f32 %v1098, %v1266
      %v1268 = vpop.f32.mrf.mxu0
      %v1269 = vadd.f32 %v1100, %v1268
      %1270 = vdwg.mxu0
      %v1271 = vadd.f32 %v337, %v1112
      %v1272 = vadd.f32 %v338, %v1114
      %v1273 = vadd.f32 %v339, %v1117
      %v1274 = vadd.f32 %v340, %v1119
      %v1275 = vadd.f32 %v341, %v1122
      %v1276 = vadd.f32 %v342, %v1124
      %v1277 = vadd.f32 %v343, %v1127
      %v1278 = vadd.f32 %v344, %v1129
      %v1279 = vadd.f32 %v345, %v1132
      %v1280 = vadd.f32 %v346, %v1134
      %v1281 = vadd.f32 %v347, %v1137
      %v1282 = vadd.f32 %v348, %v1139
      %v1283 = vadd.f32 %v349, %v1142
      %v1284 = vadd.f32 %v350, %v1144
      %v1285 = vadd.f32 %v351, %v1147
      %v1286 = vadd.f32 %v352, %v1149
      %v1287 = vadd.f32 %v353, %v1152
      %v1288 = vadd.f32 %v354, %v1154
      %v1289 = vadd.f32 %v355, %v1157
      %v1290 = vadd.f32 %v356, %v1159
      %v1291 = vadd.f32 %v357, %v1162
      %v1292 = vadd.f32 %v358, %v1164
      %v1293 = vadd.f32 %v359, %v1167
      %v1294 = vadd.f32 %v360, %v1169
      %v1295 = vadd.f32 %v361, %v1172
      %v1296 = vadd.f32 %v362, %v1174
      %v1297 = vadd.f32 %v363, %v1177
      %v1298 = vadd.f32 %v364, %v1179
      %v1299 = vadd.f32 %v365, %v1182
      %v1300 = vadd.f32 %v366, %v1184
      %v1301 = vadd.f32 %v367, %v1187
      %v1302 = vadd.f32 %v368, %v1189
      %v1303 = vadd.f32 %v369, %v1192
      %v1304 = vadd.f32 %v370, %v1194
      %v1305 = vadd.f32 %v371, %v1197
      %v1306 = vadd.f32 %v372, %v1199
      %v1307 = vadd.f32 %v373, %v1202
      %v1308 = vadd.f32 %v374, %v1204
      %v1309 = vadd.f32 %v375, %v1207
      %v1310 = vadd.f32 %v376, %v1209
      %v1311 = vadd.f32 %v377, %v1212
      %v1312 = vadd.f32 %v378, %v1214
      %v1313 = vadd.f32 %v379, %v1217
      %v1314 = vadd.f32 %v380, %v1219
      %v1315 = vadd.f32 %v381, %v1222
      %v1316 = vadd.f32 %v382, %v1224
      %v1317 = vadd.f32 %v383, %v1227
      %v1318 = vadd.f32 %v384, %v1229
      %v1319 = vadd.f32 %v385, %v1232
      %v1320 = vadd.f32 %v386, %v1234
      %v1321 = vadd.f32 %v387, %v1237
      %v1322 = vadd.f32 %v388, %v1239
      %v1323 = vadd.f32 %v389, %v1242
      %v1324 = vadd.f32 %v390, %v1244
      %v1325 = vadd.f32 %v391, %v1247
      %v1326 = vadd.f32 %v392, %v1249
      %v1327 = vadd.f32 %v393, %v1252
      %v1328 = vadd.f32 %v394, %v1254
      %v1329 = vadd.f32 %v395, %v1257
      %v1330 = vadd.f32 %v396, %v1259
      %v1331 = vadd.f32 %v397, %v1262
      %v1332 = vadd.f32 %v398, %v1264
      %v1333 = vadd.f32 %v399, %v1267
      %v1334 = vadd.f32 %v400, %v1269
      %vm1335 = vcmask 523264
      %1336 = vst.msk [vmem:[#allocation2] sm:$0xff] %vm1335, %v1271
      %1337 = vst.msk [vmem:[#allocation2 + $0x8] sm:$0xff] %vm1335, %v1272
      %1338 = vst.msk [vmem:[#allocation2 + $0x10] sm:$0xff] %vm1335, %v1273
      %1339 = vst.msk [vmem:[#allocation2 + $0x18] sm:$0xff] %vm1335, %v1274
      %1340 = vst.msk [vmem:[#allocation2 + $0x20] sm:$0xff] %vm1335, %v1275
      %1341 = vst.msk [vmem:[#allocation2 + $0x28] sm:$0xff] %vm1335, %v1276
      %1342 = vst.msk [vmem:[#allocation2 + $0x30] sm:$0xff] %vm1335, %v1277
      %1343 = vst.msk [vmem:[#allocation2 + $0x38] sm:$0xff] %vm1335, %v1278
      %1344 = vst.msk [vmem:[#allocation2 + $0x40] sm:$0xff] %vm1335, %v1279
      %1345 = vst.msk [vmem:[#allocation2 + $0x48] sm:$0xff] %vm1335, %v1280
      %1346 = vst.msk [vmem:[#allocation2 + $0x50] sm:$0xff] %vm1335, %v1281
      %1347 = vst.msk [vmem:[#allocation2 + $0x58] sm:$0xff] %vm1335, %v1282
      %1348 = vst.msk [vmem:[#allocation2 + $0x60] sm:$0xff] %vm1335, %v1283
      %1349 = vst.msk [vmem:[#allocation2 + $0x68] sm:$0xff] %vm1335, %v1284
      %1350 = vst.msk [vmem:[#allocation2 + $0x70] sm:$0xff] %vm1335, %v1285
      %1351 = vst.msk [vmem:[#allocation2 + $0x78] sm:$0xff] %vm1335, %v1286
      %1352 = vst.msk [vmem:[#allocation2 + $0x80] sm:$0xff] %vm1335, %v1287
      %1353 = vst.msk [vmem:[#allocation2 + $0x88] sm:$0xff] %vm1335, %v1288
      %1354 = vst.msk [vmem:[#allocation2 + $0x90] sm:$0xff] %vm1335, %v1289
      %1355 = vst.msk [vmem:[#allocation2 + $0x98] sm:$0xff] %vm1335, %v1290
      %1356 = vst.msk [vmem:[#allocation2 + $0xa0] sm:$0xff] %vm1335, %v1291
      %1357 = vst.msk [vmem:[#allocation2 + $0xa8] sm:$0xff] %vm1335, %v1292
      %1358 = vst.msk [vmem:[#allocation2 + $0xb0] sm:$0xff] %vm1335, %v1293
      %1359 = vst.msk [vmem:[#allocation2 + $0xb8] sm:$0xff] %vm1335, %v1294
      %1360 = vst.msk [vmem:[#allocation2 + $0xc0] sm:$0xff] %vm1335, %v1295
      %1361 = vst.msk [vmem:[#allocation2 + $0xc8] sm:$0xff] %vm1335, %v1296
      %1362 = vst.msk [vmem:[#allocation2 + $0xd0] sm:$0xff] %vm1335, %v1297
      %1363 = vst.msk [vmem:[#allocation2 + $0xd8] sm:$0xff] %vm1335, %v1298
      %1364 = vst.msk [vmem:[#allocation2 + $0xe0] sm:$0xff] %vm1335, %v1299
      %1365 = vst.msk [vmem:[#allocation2 + $0xe8] sm:$0xff] %vm1335, %v1300
      %1366 = vst.msk [vmem:[#allocation2 + $0xf0] sm:$0xff] %vm1335, %v1301
      %1367 = vst.msk [vmem:[#allocation2 + $0xf8] sm:$0xff] %vm1335, %v1302
      %1368 = vst.msk [vmem:[#allocation2 + $0x100] sm:$0xff] %vm1335, %v1303
      %1369 = vst.msk [vmem:[#allocation2 + $0x108] sm:$0xff] %vm1335, %v1304
      %1370 = vst.msk [vmem:[#allocation2 + $0x110] sm:$0xff] %vm1335, %v1305
      %1371 = vst.msk [vmem:[#allocation2 + $0x118] sm:$0xff] %vm1335, %v1306
      %1372 = vst.msk [vmem:[#allocation2 + $0x120] sm:$0xff] %vm1335, %v1307
      %1373 = vst.msk [vmem:[#allocation2 + $0x128] sm:$0xff] %vm1335, %v1308
      %1374 = vst.msk [vmem:[#allocation2 + $0x130] sm:$0xff] %vm1335, %v1309
      %1375 = vst.msk [vmem:[#allocation2 + $0x138] sm:$0xff] %vm1335, %v1310
      %1376 = vst.msk [vmem:[#allocation2 + $0x140] sm:$0xff] %vm1335, %v1311
      %1377 = vst.msk [vmem:[#allocation2 + $0x148] sm:$0xff] %vm1335, %v1312
      %1378 = vst.msk [vmem:[#allocation2 + $0x150] sm:$0xff] %vm1335, %v1313
      %1379 = vst.msk [vmem:[#allocation2 + $0x158] sm:$0xff] %vm1335, %v1314
      %1380 = vst.msk [vmem:[#allocation2 + $0x160] sm:$0xff] %vm1335, %v1315
      %1381 = vst.msk [vmem:[#allocation2 + $0x168] sm:$0xff] %vm1335, %v1316
      %1382 = vst.msk [vmem:[#allocation2 + $0x170] sm:$0xff] %vm1335, %v1317
      %1383 = vst.msk [vmem:[#allocation2 + $0x178] sm:$0xff] %vm1335, %v1318
      %1384 = vst.msk [vmem:[#allocation2 + $0x180] sm:$0xff] %vm1335, %v1319
      %1385 = vst.msk [vmem:[#allocation2 + $0x188] sm:$0xff] %vm1335, %v1320
      %1386 = vst.msk [vmem:[#allocation2 + $0x190] sm:$0xff] %vm1335, %v1321
      %1387 = vst.msk [vmem:[#allocation2 + $0x198] sm:$0xff] %vm1335, %v1322
      %1388 = vst.msk [vmem:[#allocation2 + $0x1a0] sm:$0xff] %vm1335, %v1323
      %1389 = vst.msk [vmem:[#allocation2 + $0x1a8] sm:$0xff] %vm1335, %v1324
      %1390 = vst.msk [vmem:[#allocation2 + $0x1b0] sm:$0xff] %vm1335, %v1325
      %1391 = vst.msk [vmem:[#allocation2 + $0x1b8] sm:$0xff] %vm1335, %v1326
      %1392 = vst.msk [vmem:[#allocation2 + $0x1c0] sm:$0xff] %vm1335, %v1327
      %1393 = vst.msk [vmem:[#allocation2 + $0x1c8] sm:$0xff] %vm1335, %v1328
      %1394 = vst.msk [vmem:[#allocation2 + $0x1d0] sm:$0xff] %vm1335, %v1329
      %1395 = vst.msk [vmem:[#allocation2 + $0x1d8] sm:$0xff] %vm1335, %v1330
      %1396 = vst.msk [vmem:[#allocation2 + $0x1e0] sm:$0xff] %vm1335, %v1331
      %1397 = vst.msk [vmem:[#allocation2 + $0x1e8] sm:$0xff] %vm1335, %v1332
      %1398 = vst.msk [vmem:[#allocation2 + $0x1f0] sm:$0xff] %vm1335, %v1333
      %1399 = vst.msk [vmem:[#allocation2 + $0x1f8] sm:$0xff] %vm1335, %v1334
      // Predicated region
      $region37: #{tpu_custom_call.1} parent=31 // pred_check
        %p1400 = pneg %p268
      $region38: #{tpu_custom_call.1} parent=31 // pred_check_branch
        %1402 = sbr.rel (%p1400) target = $region40
      $region39: #{tpu_custom_call.1} parent=31 // pred_region
        %v1403 = vld [vmem:[#allocation2] sm:$0xff]
        %v1404 = vld [vmem:[#allocation2 + $0x8] sm:$0xff]
        %v1405 = vld [vmem:[#allocation2 + $0x10] sm:$0xff]
        %v1406 = vld [vmem:[#allocation2 + $0x18] sm:$0xff]
        %v1407 = vld [vmem:[#allocation2 + $0x20] sm:$0xff]
        %v1408 = vld [vmem:[#allocation2 + $0x28] sm:$0xff]
        %v1409 = vld [vmem:[#allocation2 + $0x30] sm:$0xff]
        %v1410 = vld [vmem:[#allocation2 + $0x38] sm:$0xff]
        %v1411 = vld [vmem:[#allocation2 + $0x40] sm:$0xff]
        %v1412 = vld [vmem:[#allocation2 + $0x48] sm:$0xff]
        %v1413 = vld [vmem:[#allocation2 + $0x50] sm:$0xff]
        %v1414 = vld [vmem:[#allocation2 + $0x58] sm:$0xff]
        %v1415 = vld [vmem:[#allocation2 + $0x60] sm:$0xff]
        %v1416 = vld [vmem:[#allocation2 + $0x68] sm:$0xff]
        %v1417 = vld [vmem:[#allocation2 + $0x70] sm:$0xff]
        %v1418 = vld [vmem:[#allocation2 + $0x78] sm:$0xff]
        %v1419 = vld [vmem:[#allocation2 + $0x80] sm:$0xff]
        %v1420 = vld [vmem:[#allocation2 + $0x88] sm:$0xff]
        %v1421 = vld [vmem:[#allocation2 + $0x90] sm:$0xff]
        %v1422 = vld [vmem:[#allocation2 + $0x98] sm:$0xff]
        %v1423 = vld [vmem:[#allocation2 + $0xa0] sm:$0xff]
        %v1424 = vld [vmem:[#allocation2 + $0xa8] sm:$0xff]
        %v1425 = vld [vmem:[#allocation2 + $0xb0] sm:$0xff]
        %v1426 = vld [vmem:[#allocation2 + $0xb8] sm:$0xff]
        %v1427 = vld [vmem:[#allocation2 + $0xc0] sm:$0xff]
        %v1428 = vld [vmem:[#allocation2 + $0xc8] sm:$0xff]
        %v1429 = vld [vmem:[#allocation2 + $0xd0] sm:$0xff]
        %v1430 = vld [vmem:[#allocation2 + $0xd8] sm:$0xff]
        %v1431 = vld [vmem:[#allocation2 + $0xe0] sm:$0xff]
        %v1432 = vld [vmem:[#allocation2 + $0xe8] sm:$0xff]
        %v1433 = vld [vmem:[#allocation2 + $0xf0] sm:$0xff]
        %v1434 = vld [vmem:[#allocation2 + $0xf8] sm:$0xff]
        %v1435 = vld [vmem:[#allocation2 + $0x100] sm:$0xff]
        %v1436 = vld [vmem:[#allocation2 + $0x108] sm:$0xff]
        %v1437 = vld [vmem:[#allocation2 + $0x110] sm:$0xff]
        %v1438 = vld [vmem:[#allocation2 + $0x118] sm:$0xff]
        %v1439 = vld [vmem:[#allocation2 + $0x120] sm:$0xff]
        %v1440 = vld [vmem:[#allocation2 + $0x128] sm:$0xff]
        %v1441 = vld [vmem:[#allocation2 + $0x130] sm:$0xff]
        %v1442 = vld [vmem:[#allocation2 + $0x138] sm:$0xff]
        %v1443 = vld [vmem:[#allocation2 + $0x140] sm:$0xff]
        %v1444 = vld [vmem:[#allocation2 + $0x148] sm:$0xff]
        %v1445 = vld [vmem:[#allocation2 + $0x150] sm:$0xff]
        %v1446 = vld [vmem:[#allocation2 + $0x158] sm:$0xff]
        %v1447 = vld [vmem:[#allocation2 + $0x160] sm:$0xff]
        %v1448 = vld [vmem:[#allocation2 + $0x168] sm:$0xff]
        %v1449 = vld [vmem:[#allocation2 + $0x170] sm:$0xff]
        %v1450 = vld [vmem:[#allocation2 + $0x178] sm:$0xff]
        %v1451 = vld [vmem:[#allocation2 + $0x180] sm:$0xff]
        %v1452 = vld [vmem:[#allocation2 + $0x188] sm:$0xff]
        %v1453 = vld [vmem:[#allocation2 + $0x190] sm:$0xff]
        %v1454 = vld [vmem:[#allocation2 + $0x198] sm:$0xff]
        %v1455 = vld [vmem:[#allocation2 + $0x1a0] sm:$0xff]
        %v1456 = vld [vmem:[#allocation2 + $0x1a8] sm:$0xff]
        %v1457 = vld [vmem:[#allocation2 + $0x1b0] sm:$0xff]
        %v1458 = vld [vmem:[#allocation2 + $0x1b8] sm:$0xff]
        %v1459 = vld [vmem:[#allocation2 + $0x1c0] sm:$0xff]
        %v1460 = vld [vmem:[#allocation2 + $0x1c8] sm:$0xff]
        %v1461 = vld [vmem:[#allocation2 + $0x1d0] sm:$0xff]
        %v1462 = vld [vmem:[#allocation2 + $0x1d8] sm:$0xff]
        %v1463 = vld [vmem:[#allocation2 + $0x1e0] sm:$0xff]
        %v1464 = vld [vmem:[#allocation2 + $0x1e8] sm:$0xff]
        %v1465 = vld [vmem:[#allocation2 + $0x1f0] sm:$0xff]
        %v1466 = vld [vmem:[#allocation2 + $0x1f8] sm:$0xff]
        %v1467 = vld [vmem:[%s257] sm:$0x1]
        %v1469 = vperm.slane %v1467, 0
        %v1471 = vadd.f32 %v1403, %v1469
        %v1472 = vadd.f32 %v1404, %v1469
        %v1473 = vadd.f32 %v1405, %v1469
        %v1474 = vadd.f32 %v1406, %v1469
        %v1475 = vadd.f32 %v1407, %v1469
        %v1476 = vadd.f32 %v1408, %v1469
        %v1477 = vadd.f32 %v1409, %v1469
        %v1478 = vadd.f32 %v1410, %v1469
        %v1479 = vadd.f32 %v1411, %v1469
        %v1480 = vadd.f32 %v1412, %v1469
        %v1481 = vadd.f32 %v1413, %v1469
        %v1482 = vadd.f32 %v1414, %v1469
        %v1483 = vadd.f32 %v1415, %v1469
        %v1484 = vadd.f32 %v1416, %v1469
        %v1485 = vadd.f32 %v1417, %v1469
        %v1486 = vadd.f32 %v1418, %v1469
        %v1487 = vadd.f32 %v1419, %v1469
        %v1488 = vadd.f32 %v1420, %v1469
        %v1489 = vadd.f32 %v1421, %v1469
        %v1490 = vadd.f32 %v1422, %v1469
        %v1491 = vadd.f32 %v1423, %v1469
        %v1492 = vadd.f32 %v1424, %v1469
        %v1493 = vadd.f32 %v1425, %v1469
        %v1494 = vadd.f32 %v1426, %v1469
        %v1495 = vadd.f32 %v1427, %v1469
        %v1496 = vadd.f32 %v1428, %v1469
        %v1497 = vadd.f32 %v1429, %v1469
        %v1498 = vadd.f32 %v1430, %v1469
        %v1499 = vadd.f32 %v1431, %v1469
        %v1500 = vadd.f32 %v1432, %v1469
        %v1501 = vadd.f32 %v1433, %v1469
        %v1502 = vadd.f32 %v1434, %v1469
        %v1503 = vadd.f32 %v1435, %v1469
        %v1504 = vadd.f32 %v1436, %v1469
        %v1505 = vadd.f32 %v1437, %v1469
        %v1506 = vadd.f32 %v1438, %v1469
        %v1507 = vadd.f32 %v1439, %v1469
        %v1508 = vadd.f32 %v1440, %v1469
        %v1509 = vadd.f32 %v1441, %v1469
        %v1510 = vadd.f32 %v1442, %v1469
        %v1511 = vadd.f32 %v1443, %v1469
        %v1512 = vadd.f32 %v1444, %v1469
        %v1513 = vadd.f32 %v1445, %v1469
        %v1514 = vadd.f32 %v1446, %v1469
        %v1515 = vadd.f32 %v1447, %v1469
        %v1516 = vadd.f32 %v1448, %v1469
        %v1517 = vadd.f32 %v1449, %v1469
        %v1518 = vadd.f32 %v1450, %v1469
        %v1519 = vadd.f32 %v1451, %v1469
        %v1520 = vadd.f32 %v1452, %v1469
        %v1521 = vadd.f32 %v1453, %v1469
        %v1522 = vadd.f32 %v1454, %v1469
        %v1523 = vadd.f32 %v1455, %v1469
        %v1524 = vadd.f32 %v1456, %v1469
        %v1525 = vadd.f32 %v1457, %v1469
        %v1526 = vadd.f32 %v1458, %v1469
        %v1527 = vadd.f32 %v1459, %v1469
        %v1528 = vadd.f32 %v1460, %v1469
        %v1529 = vadd.f32 %v1461, %v1469
        %v1530 = vadd.f32 %v1462, %v1469
        %v1531 = vadd.f32 %v1463, %v1469
        %v1532 = vadd.f32 %v1464, %v1469
        %v1533 = vadd.f32 %v1465, %v1469
        %v1534 = vadd.f32 %v1466, %v1469
        %vm1535 = vcmp.gt.f32.partialorder %v1471, 0.0
        %vm1536 = vcmp.gt.f32.partialorder %v1472, 0.0
        %vm1537 = vcmp.gt.f32.partialorder %v1473, 0.0
        %vm1538 = vcmp.gt.f32.partialorder %v1474, 0.0
        %vm1539 = vcmp.gt.f32.partialorder %v1475, 0.0
        %vm1540 = vcmp.gt.f32.partialorder %v1476, 0.0
        %vm1541 = vcmp.gt.f32.partialorder %v1477, 0.0
        %vm1542 = vcmp.gt.f32.partialorder %v1478, 0.0
        %vm1543 = vcmp.gt.f32.partialorder %v1479, 0.0
        %vm1544 = vcmp.gt.f32.partialorder %v1480, 0.0
        %vm1545 = vcmp.gt.f32.partialorder %v1481, 0.0
        %vm1546 = vcmp.gt.f32.partialorder %v1482, 0.0
        %vm1547 = vcmp.gt.f32.partialorder %v1483, 0.0
        %vm1548 = vcmp.gt.f32.partialorder %v1484, 0.0
        %vm1549 = vcmp.gt.f32.partialorder %v1485, 0.0
        %vm1550 = vcmp.gt.f32.partialorder %v1486, 0.0
        %vm1551 = vcmp.gt.f32.partialorder %v1487, 0.0
        %vm1552 = vcmp.gt.f32.partialorder %v1488, 0.0
        %vm1553 = vcmp.gt.f32.partialorder %v1489, 0.0
        %vm1554 = vcmp.gt.f32.partialorder %v1490, 0.0
        %vm1555 = vcmp.gt.f32.partialorder %v1491, 0.0
        %vm1556 = vcmp.gt.f32.partialorder %v1492, 0.0
        %vm1557 = vcmp.gt.f32.partialorder %v1493, 0.0
        %vm1558 = vcmp.gt.f32.partialorder %v1494, 0.0
        %vm1559 = vcmp.gt.f32.partialorder %v1495, 0.0
        %vm1560 = vcmp.gt.f32.partialorder %v1496, 0.0
        %vm1561 = vcmp.gt.f32.partialorder %v1497, 0.0
        %vm1562 = vcmp.gt.f32.partialorder %v1498, 0.0
        %vm1563 = vcmp.gt.f32.partialorder %v1499, 0.0
        %vm1564 = vcmp.gt.f32.partialorder %v1500, 0.0
        %vm1565 = vcmp.gt.f32.partialorder %v1501, 0.0
        %vm1566 = vcmp.gt.f32.partialorder %v1502, 0.0
        %vm1567 = vcmp.gt.f32.partialorder %v1503, 0.0
        %vm1568 = vcmp.gt.f32.partialorder %v1504, 0.0
        %vm1569 = vcmp.gt.f32.partialorder %v1505, 0.0
        %vm1570 = vcmp.gt.f32.partialorder %v1506, 0.0
        %vm1571 = vcmp.gt.f32.partialorder %v1507, 0.0
        %vm1572 = vcmp.gt.f32.partialorder %v1508, 0.0
        %vm1573 = vcmp.gt.f32.partialorder %v1509, 0.0
        %vm1574 = vcmp.gt.f32.partialorder %v1510, 0.0
        %vm1575 = vcmp.gt.f32.partialorder %v1511, 0.0
        %vm1576 = vcmp.gt.f32.partialorder %v1512, 0.0
        %vm1577 = vcmp.gt.f32.partialorder %v1513, 0.0
        %vm1578 = vcmp.gt.f32.partialorder %v1514, 0.0
        %vm1579 = vcmp.gt.f32.partialorder %v1515, 0.0
        %vm1580 = vcmp.gt.f32.partialorder %v1516, 0.0
        %vm1581 = vcmp.gt.f32.partialorder %v1517, 0.0
        %vm1582 = vcmp.gt.f32.partialorder %v1518, 0.0
        %vm1583 = vcmp.gt.f32.partialorder %v1519, 0.0
        %vm1584 = vcmp.gt.f32.partialorder %v1520, 0.0
        %vm1585 = vcmp.gt.f32.partialorder %v1521, 0.0
        %vm1586 = vcmp.gt.f32.partialorder %v1522, 0.0
        %vm1587 = vcmp.gt.f32.partialorder %v1523, 0.0
        %vm1588 = vcmp.gt.f32.partialorder %v1524, 0.0
        %vm1589 = vcmp.gt.f32.partialorder %v1525, 0.0
        %vm1590 = vcmp.gt.f32.partialorder %v1526, 0.0
        %vm1591 = vcmp.gt.f32.partialorder %v1527, 0.0
        %vm1592 = vcmp.gt.f32.partialorder %v1528, 0.0
        %vm1593 = vcmp.gt.f32.partialorder %v1529, 0.0
        %vm1594 = vcmp.gt.f32.partialorder %v1530, 0.0
        %vm1595 = vcmp.gt.f32.partialorder %v1531, 0.0
        %vm1596 = vcmp.gt.f32.partialorder %v1532, 0.0
        %vm1597 = vcmp.gt.f32.partialorder %v1533, 0.0
        %vm1598 = vcmp.gt.f32.partialorder %v1534, 0.0
        %v1599 = vmul.f32 %v1471, 0.1
        %v1600 = vmul.f32 %v1472, 0.1
        %v1601 = vmul.f32 %v1473, 0.1
        %v1602 = vmul.f32 %v1474, 0.1
        %v1603 = vmul.f32 %v1475, 0.1
        %v1604 = vmul.f32 %v1476, 0.1
        %v1605 = vmul.f32 %v1477, 0.1
        %v1606 = vmul.f32 %v1478, 0.1
        %v1607 = vmul.f32 %v1479, 0.1
        %v1608 = vmul.f32 %v1480, 0.1
        %v1609 = vmul.f32 %v1481, 0.1
        %v1610 = vmul.f32 %v1482, 0.1
        %v1611 = vmul.f32 %v1483, 0.1
        %v1612 = vmul.f32 %v1484, 0.1
        %v1613 = vmul.f32 %v1485, 0.1
        %v1614 = vmul.f32 %v1486, 0.1
        %v1615 = vmul.f32 %v1487, 0.1
        %v1616 = vmul.f32 %v1488, 0.1
        %v1617 = vmul.f32 %v1489, 0.1
        %v1618 = vmul.f32 %v1490, 0.1
        %v1619 = vmul.f32 %v1491, 0.1
        %v1620 = vmul.f32 %v1492, 0.1
        %v1621 = vmul.f32 %v1493, 0.1
        %v1622 = vmul.f32 %v1494, 0.1
        %v1623 = vmul.f32 %v1495, 0.1
        %v1624 = vmul.f32 %v1496, 0.1
        %v1625 = vmul.f32 %v1497, 0.1
        %v1626 = vmul.f32 %v1498, 0.1
        %v1627 = vmul.f32 %v1499, 0.1
        %v1628 = vmul.f32 %v1500, 0.1
        %v1629 = vmul.f32 %v1501, 0.1
        %v1630 = vmul.f32 %v1502, 0.1
        %v1631 = vmul.f32 %v1503, 0.1
        %v1632 = vmul.f32 %v1504, 0.1
        %v1633 = vmul.f32 %v1505, 0.1
        %v1634 = vmul.f32 %v1506, 0.1
        %v1635 = vmul.f32 %v1507, 0.1
        %v1636 = vmul.f32 %v1508, 0.1
        %v1637 = vmul.f32 %v1509, 0.1
        %v1638 = vmul.f32 %v1510, 0.1
        %v1639 = vmul.f32 %v1511, 0.1
        %v1640 = vmul.f32 %v1512, 0.1
        %v1641 = vmul.f32 %v1513, 0.1
        %v1642 = vmul.f32 %v1514, 0.1
        %v1643 = vmul.f32 %v1515, 0.1
        %v1644 = vmul.f32 %v1516, 0.1
        %v1645 = vmul.f32 %v1517, 0.1
        %v1646 = vmul.f32 %v1518, 0.1
        %v1647 = vmul.f32 %v1519, 0.1
        %v1648 = vmul.f32 %v1520, 0.1
        %v1649 = vmul.f32 %v1521, 0.1
        %v1650 = vmul.f32 %v1522, 0.1
        %v1651 = vmul.f32 %v1523, 0.1
        %v1652 = vmul.f32 %v1524, 0.1
        %v1653 = vmul.f32 %v1525, 0.1
        %v1654 = vmul.f32 %v1526, 0.1
        %v1655 = vmul.f32 %v1527, 0.1
        %v1656 = vmul.f32 %v1528, 0.1
        %v1657 = vmul.f32 %v1529, 0.1
        %v1658 = vmul.f32 %v1530, 0.1
        %v1659 = vmul.f32 %v1531, 0.1
        %v1660 = vmul.f32 %v1532, 0.1
        %v1661 = vmul.f32 %v1533, 0.1
        %v1662 = vmul.f32 %v1534, 0.1
        %v1663 = vsel %vm1535, %v1471, %v1599
        %v1664 = vsel %vm1536, %v1472, %v1600
        %v1665 = vsel %vm1537, %v1473, %v1601
        %v1666 = vsel %vm1538, %v1474, %v1602
        %v1667 = vsel %vm1539, %v1475, %v1603
        %v1668 = vsel %vm1540, %v1476, %v1604
        %v1669 = vsel %vm1541, %v1477, %v1605
        %v1670 = vsel %vm1542, %v1478, %v1606
        %v1671 = vsel %vm1543, %v1479, %v1607
        %v1672 = vsel %vm1544, %v1480, %v1608
        %v1673 = vsel %vm1545, %v1481, %v1609
        %v1674 = vsel %vm1546, %v1482, %v1610
        %v1675 = vsel %vm1547, %v1483, %v1611
        %v1676 = vsel %vm1548, %v1484, %v1612
        %v1677 = vsel %vm1549, %v1485, %v1613
        %v1678 = vsel %vm1550, %v1486, %v1614
        %v1679 = vsel %vm1551, %v1487, %v1615
        %v1680 = vsel %vm1552, %v1488, %v1616
        %v1681 = vsel %vm1553, %v1489, %v1617
        %v1682 = vsel %vm1554, %v1490, %v1618
        %v1683 = vsel %vm1555, %v1491, %v1619
        %v1684 = vsel %vm1556, %v1492, %v1620
        %v1685 = vsel %vm1557, %v1493, %v1621
        %v1686 = vsel %vm1558, %v1494, %v1622
        %v1687 = vsel %vm1559, %v1495, %v1623
        %v1688 = vsel %vm1560, %v1496, %v1624
        %v1689 = vsel %vm1561, %v1497, %v1625
        %v1690 = vsel %vm1562, %v1498, %v1626
        %v1691 = vsel %vm1563, %v1499, %v1627
        %v1692 = vsel %vm1564, %v1500, %v1628
        %v1693 = vsel %vm1565, %v1501, %v1629
        %v1694 = vsel %vm1566, %v1502, %v1630
        %v1695 = vsel %vm1567, %v1503, %v1631
        %v1696 = vsel %vm1568, %v1504, %v1632
        %v1697 = vsel %vm1569, %v1505, %v1633
        %v1698 = vsel %vm1570, %v1506, %v1634
        %v1699 = vsel %vm1571, %v1507, %v1635
        %v1700 = vsel %vm1572, %v1508, %v1636
        %v1701 = vsel %vm1573, %v1509, %v1637
        %v1702 = vsel %vm1574, %v1510, %v1638
        %v1703 = vsel %vm1575, %v1511, %v1639
        %v1704 = vsel %vm1576, %v1512, %v1640
        %v1705 = vsel %vm1577, %v1513, %v1641
        %v1706 = vsel %vm1578, %v1514, %v1642
        %v1707 = vsel %vm1579, %v1515, %v1643
        %v1708 = vsel %vm1580, %v1516, %v1644
        %v1709 = vsel %vm1581, %v1517, %v1645
        %v1710 = vsel %vm1582, %v1518, %v1646
        %v1711 = vsel %vm1583, %v1519, %v1647
        %v1712 = vsel %vm1584, %v1520, %v1648
        %v1713 = vsel %vm1585, %v1521, %v1649
        %v1714 = vsel %vm1586, %v1522, %v1650
        %v1715 = vsel %vm1587, %v1523, %v1651
        %v1716 = vsel %vm1588, %v1524, %v1652
        %v1717 = vsel %vm1589, %v1525, %v1653
        %v1718 = vsel %vm1590, %v1526, %v1654
        %v1719 = vsel %vm1591, %v1527, %v1655
        %v1720 = vsel %vm1592, %v1528, %v1656
        %v1721 = vsel %vm1593, %v1529, %v1657
        %v1722 = vsel %vm1594, %v1530, %v1658
        %v1723 = vsel %vm1595, %v1531, %v1659
        %v1724 = vsel %vm1596, %v1532, %v1660
        %v1725 = vsel %vm1597, %v1533, %v1661
        %v1726 = vsel %vm1598, %v1534, %v1662
        %v1727 = vpack.c.bf16 %v1663, %v1663
        %v1728 = vpack.c.bf16 %v1664, %v1664
        %v1729 = vpack.c.bf16 %v1665, %v1665
        %v1730 = vpack.c.bf16 %v1666, %v1666
        %v1731 = vpack.c.bf16 %v1667, %v1667
        %v1732 = vpack.c.bf16 %v1668, %v1668
        %v1733 = vpack.c.bf16 %v1669, %v1669
        %v1734 = vpack.c.bf16 %v1670, %v1670
        %v1735 = vpack.c.bf16 %v1671, %v1671
        %v1736 = vpack.c.bf16 %v1672, %v1672
        %v1737 = vpack.c.bf16 %v1673, %v1673
        %v1738 = vpack.c.bf16 %v1674, %v1674
        %v1739 = vpack.c.bf16 %v1675, %v1675
        %v1740 = vpack.c.bf16 %v1676, %v1676
        %v1741 = vpack.c.bf16 %v1677, %v1677
        %v1742 = vpack.c.bf16 %v1678, %v1678
        %v1743 = vpack.c.bf16 %v1679, %v1679
        %v1744 = vpack.c.bf16 %v1680, %v1680
        %v1745 = vpack.c.bf16 %v1681, %v1681
        %v1746 = vpack.c.bf16 %v1682, %v1682
        %v1747 = vpack.c.bf16 %v1683, %v1683
        %v1748 = vpack.c.bf16 %v1684, %v1684
        %v1749 = vpack.c.bf16 %v1685, %v1685
        %v1750 = vpack.c.bf16 %v1686, %v1686
        %v1751 = vpack.c.bf16 %v1687, %v1687
        %v1752 = vpack.c.bf16 %v1688, %v1688
        %v1753 = vpack.c.bf16 %v1689, %v1689
        %v1754 = vpack.c.bf16 %v1690, %v1690
        %v1755 = vpack.c.bf16 %v1691, %v1691
        %v1756 = vpack.c.bf16 %v1692, %v1692
        %v1757 = vpack.c.bf16 %v1693, %v1693
        %v1758 = vpack.c.bf16 %v1694, %v1694
        %v1759 = vpack.c.bf16 %v1695, %v1695
        %v1760 = vpack.c.bf16 %v1696, %v1696
        %v1761 = vpack.c.bf16 %v1697, %v1697
        %v1762 = vpack.c.bf16 %v1698, %v1698
        %v1763 = vpack.c.bf16 %v1699, %v1699
        %v1764 = vpack.c.bf16 %v1700, %v1700
        %v1765 = vpack.c.bf16 %v1701, %v1701
        %v1766 = vpack.c.bf16 %v1702, %v1702
        %v1767 = vpack.c.bf16 %v1703, %v1703
        %v1768 = vpack.c.bf16 %v1704, %v1704
        %v1769 = vpack.c.bf16 %v1705, %v1705
        %v1770 = vpack.c.bf16 %v1706, %v1706
        %v1771 = vpack.c.bf16 %v1707, %v1707
        %v1772 = vpack.c.bf16 %v1708, %v1708
        %v1773 = vpack.c.bf16 %v1709, %v1709
        %v1774 = vpack.c.bf16 %v1710, %v1710
        %v1775 = vpack.c.bf16 %v1711, %v1711
        %v1776 = vpack.c.bf16 %v1712, %v1712
        %v1777 = vpack.c.bf16 %v1713, %v1713
        %v1778 = vpack.c.bf16 %v1714, %v1714
        %v1779 = vpack.c.bf16 %v1715, %v1715
        %v1780 = vpack.c.bf16 %v1716, %v1716
        %v1781 = vpack.c.bf16 %v1717, %v1717
        %v1782 = vpack.c.bf16 %v1718, %v1718
        %v1783 = vpack.c.bf16 %v1719, %v1719
        %v1784 = vpack.c.bf16 %v1720, %v1720
        %v1785 = vpack.c.bf16 %v1721, %v1721
        %v1786 = vpack.c.bf16 %v1722, %v1722
        %v1787 = vpack.c.bf16 %v1723, %v1723
        %v1788 = vpack.c.bf16 %v1724, %v1724
        %v1789 = vpack.c.bf16 %v1725, %v1725
        %v1790 = vpack.c.bf16 %v1726, %v1726
        %vm1791 = vcmask 519168
        %1792 = vst.msk [vmem:[%s265] sm:$0xf] %vm1791, %v1727
        %1793 = vst.msk [vmem:[%s265 + $0x4] sm:$0xf] %vm1791, %v1728
        %1794 = vst.msk [vmem:[%s265 + $0x8] sm:$0xf] %vm1791, %v1729
        %1795 = vst.msk [vmem:[%s265 + $0xc] sm:$0xf] %vm1791, %v1730
        %1796 = vst.msk [vmem:[%s265 + $0x10] sm:$0xf] %vm1791, %v1731
        %1797 = vst.msk [vmem:[%s265 + $0x14] sm:$0xf] %vm1791, %v1732
        %1798 = vst.msk [vmem:[%s265 + $0x18] sm:$0xf] %vm1791, %v1733
        %1799 = vst.msk [vmem:[%s265 + $0x1c] sm:$0xf] %vm1791, %v1734
        %1800 = vst.msk [vmem:[%s265 + $0x20] sm:$0xf] %vm1791, %v1735
        %1801 = vst.msk [vmem:[%s265 + $0x24] sm:$0xf] %vm1791, %v1736
        %1802 = vst.msk [vmem:[%s265 + $0x28] sm:$0xf] %vm1791, %v1737
        %1803 = vst.msk [vmem:[%s265 + $0x2c] sm:$0xf] %vm1791, %v1738
        %1804 = vst.msk [vmem:[%s265 + $0x30] sm:$0xf] %vm1791, %v1739
        %1805 = vst.msk [vmem:[%s265 + $0x34] sm:$0xf] %vm1791, %v1740
        %1806 = vst.msk [vmem:[%s265 + $0x38] sm:$0xf] %vm1791, %v1741
        %1807 = vst.msk [vmem:[%s265 + $0x3c] sm:$0xf] %vm1791, %v1742
        %1808 = vst.msk [vmem:[%s265 + $0x40] sm:$0xf] %vm1791, %v1743
        %1809 = vst.msk [vmem:[%s265 + $0x44] sm:$0xf] %vm1791, %v1744
        %1810 = vst.msk [vmem:[%s265 + $0x48] sm:$0xf] %vm1791, %v1745
        %1811 = vst.msk [vmem:[%s265 + $0x4c] sm:$0xf] %vm1791, %v1746
        %1812 = vst.msk [vmem:[%s265 + $0x50] sm:$0xf] %vm1791, %v1747
        %1813 = vst.msk [vmem:[%s265 + $0x54] sm:$0xf] %vm1791, %v1748
        %1814 = vst.msk [vmem:[%s265 + $0x58] sm:$0xf] %vm1791, %v1749
        %1815 = vst.msk [vmem:[%s265 + $0x5c] sm:$0xf] %vm1791, %v1750
        %1816 = vst.msk [vmem:[%s265 + $0x60] sm:$0xf] %vm1791, %v1751
        %1817 = vst.msk [vmem:[%s265 + $0x64] sm:$0xf] %vm1791, %v1752
        %1818 = vst.msk [vmem:[%s265 + $0x68] sm:$0xf] %vm1791, %v1753
        %1819 = vst.msk [vmem:[%s265 + $0x6c] sm:$0xf] %vm1791, %v1754
        %1820 = vst.msk [vmem:[%s265 + $0x70] sm:$0xf] %vm1791, %v1755
        %1821 = vst.msk [vmem:[%s265 + $0x74] sm:$0xf] %vm1791, %v1756
        %1822 = vst.msk [vmem:[%s265 + $0x78] sm:$0xf] %vm1791, %v1757
        %1823 = vst.msk [vmem:[%s265 + $0x7c] sm:$0xf] %vm1791, %v1758
        %1824 = vst.msk [vmem:[%s265 + $0x80] sm:$0xf] %vm1791, %v1759
        %1825 = vst.msk [vmem:[%s265 + $0x84] sm:$0xf] %vm1791, %v1760
        %1826 = vst.msk [vmem:[%s265 + $0x88] sm:$0xf] %vm1791, %v1761
        %1827 = vst.msk [vmem:[%s265 + $0x8c] sm:$0xf] %vm1791, %v1762
        %1828 = vst.msk [vmem:[%s265 + $0x90] sm:$0xf] %vm1791, %v1763
        %1829 = vst.msk [vmem:[%s265 + $0x94] sm:$0xf] %vm1791, %v1764
        %1830 = vst.msk [vmem:[%s265 + $0x98] sm:$0xf] %vm1791, %v1765
        %1831 = vst.msk [vmem:[%s265 + $0x9c] sm:$0xf] %vm1791, %v1766
        %1832 = vst.msk [vmem:[%s265 + $0xa0] sm:$0xf] %vm1791, %v1767
        %1833 = vst.msk [vmem:[%s265 + $0xa4] sm:$0xf] %vm1791, %v1768
        %1834 = vst.msk [vmem:[%s265 + $0xa8] sm:$0xf] %vm1791, %v1769
        %1835 = vst.msk [vmem:[%s265 + $0xac] sm:$0xf] %vm1791, %v1770
        %1836 = vst.msk [vmem:[%s265 + $0xb0] sm:$0xf] %vm1791, %v1771
        %1837 = vst.msk [vmem:[%s265 + $0xb4] sm:$0xf] %vm1791, %v1772
        %1838 = vst.msk [vmem:[%s265 + $0xb8] sm:$0xf] %vm1791, %v1773
        %1839 = vst.msk [vmem:[%s265 + $0xbc] sm:$0xf] %vm1791, %v1774
        %1840 = vst.msk [vmem:[%s265 + $0xc0] sm:$0xf] %vm1791, %v1775
        %1841 = vst.msk [vmem:[%s265 + $0xc4] sm:$0xf] %vm1791, %v1776
        %1842 = vst.msk [vmem:[%s265 + $0xc8] sm:$0xf] %vm1791, %v1777
        %1843 = vst.msk [vmem:[%s265 + $0xcc] sm:$0xf] %vm1791, %v1778
        %1844 = vst.msk [vmem:[%s265 + $0xd0] sm:$0xf] %vm1791, %v1779
        %1845 = vst.msk [vmem:[%s265 + $0xd4] sm:$0xf] %vm1791, %v1780
        %1846 = vst.msk [vmem:[%s265 + $0xd8] sm:$0xf] %vm1791, %v1781
        %1847 = vst.msk [vmem:[%s265 + $0xdc] sm:$0xf] %vm1791, %v1782
        %1848 = vst.msk [vmem:[%s265 + $0xe0] sm:$0xf] %vm1791, %v1783
        %1849 = vst.msk [vmem:[%s265 + $0xe4] sm:$0xf] %vm1791, %v1784
        %1850 = vst.msk [vmem:[%s265 + $0xe8] sm:$0xf] %vm1791, %v1785
        %1851 = vst.msk [vmem:[%s265 + $0xec] sm:$0xf] %vm1791, %v1786
        %1852 = vst.msk [vmem:[%s265 + $0xf0] sm:$0xf] %vm1791, %v1787
        %1853 = vst.msk [vmem:[%s265 + $0xf4] sm:$0xf] %vm1791, %v1788
        %1854 = vst.msk [vmem:[%s265 + $0xf8] sm:$0xf] %vm1791, %v1789
        %1855 = vst.msk [vmem:[%s265 + $0xfc] sm:$0xf] %vm1791, %v1790
      $region40: #{tpu_custom_call.1} parent=31 // pred_fallthru
        _
      %s1856 = smul.u32 64, %s19
      %p1857 = scmp.lt.s32.totalorder %s1856, 255
      %s1858 = scalar_select %p1857, %s1856, 255
      %p1859 = scmp.lt.s32.totalorder %s20, 0
      %s1860 = scalar_select %p1859, %s20, 0
      %s1861 = sadd.s32 %s1860, %s1858
      %s1862 = smul.addr %s1861, 4
      %s1863 = scalar_lea.vmem %s3, %s1862
      // Predicated region
      $region41: #{tpu_custom_call.1} parent=31 // pred_check
        %p1864 = pneg %p135
      $region42: #{tpu_custom_call.1} parent=31 // pred_check_branch
        %1866 = sbr.rel (%p1864) target = $region44
      $region43: #{tpu_custom_call.1} parent=31 // pred_region
        %s1867 = smul.u32 64, %s19
      $region44: #{tpu_custom_call.1} parent=31 // pred_fallthru
        _
    $region32: #{tpu_custom_call.1} parent=5 // pred_fallthru
      _
    %p1868 = scmp.le.s32.totalorder 2, %s9
    // Predicated region
    $region45: #{tpu_custom_call.1} parent=5 // pred_check
      %p1869 = pneg %p1868
    $region46: #{tpu_custom_call.1} parent=5 // pred_check_branch
      %1871 = sbr.rel (%p1869) target = $region48
    $region47: #{tpu_custom_call.1} parent=5 // pred_region
      %s1872 = ssub.s32 %s9, 2
      // Predicated region
      $region49: #{tpu_custom_call.1} parent=47 // pred_check
        %p1873 = pneg %p141
      $region50: #{tpu_custom_call.1} parent=47 // pred_check_branch
        %1875 = sbr.rel (%p1873) target = $region52
      $region51: #{tpu_custom_call.1} parent=47 // pred_region
        %s1876 = smul.u32 64, %s22
        %p1877 = scmp.lt.s32.totalorder %s1876, 255
        %s1878 = scalar_select %p1877, %s1876, 255
        %p1879 = scmp.lt.s32.totalorder %s23, 0
        %s1880 = scalar_select %p1879, %s23, 0
        %s1881 = sadd.s32 %s1880, %s1878
        %s1882 = smul.addr %s1881, 4
        %s1883 = scalar_lea.vmem %s3, %s1882
      $region52: #{tpu_custom_call.1} parent=47 // pred_fallthru
        _
    $region48: #{tpu_custom_call.1} parent=5 // pred_fallthru
      _
  $region6: #{tpu_custom_call.1} parent=0 // loop_footer
    %s13 = sadd.s32 1, %s9
  $region7: #{tpu_custom_call.1} parent=0 // loop_footer_branch
    %8 = sbr.rel target = $region3
  $region8: #{tpu_custom_call.1} parent=0 // loop_exit
    _

</llo_original>
